<compile_context>
chip_gen: v7x
topology: tpu7x:2x2x1
jax: 0.10.0
libtpu: 0.0.40
codegen_flags: <defaults>
</compile_context>

<pallas_src>
import jax
import jax.numpy as jnp
import numpy as np
from jax.experimental import pallas as pl
from jax.experimental.pallas import tpu as pltpu


def _round_up(x, m):
    return ((x + m - 1) // m) * m


def _tiling(num_nodes, tile_i, tile_k):
    """Pick node tile TB_i and contraction tile TB_k (128-multiples dividing Np)."""
    n128 = _round_up(max(num_nodes, 1), 128)
    if n128 >= 256:
        # Keep at least two node tiles so the "parallel" grid axis can feed both
        # TensorCores on v7x.
        TB_i = min(tile_i, max(128, (n128 // 2) // 128 * 128))
    else:
        TB_i = 128
    Np = _round_up(num_nodes, TB_i)
    # Contraction tile: the largest multiple of TB_i that divides Np and is
    # <= tile_k.  Larger k-tiles amortize per-grid-step overhead / short DMAs.
    TB_k = TB_i
    max_k = min(tile_k, Np)
    t = 2 * TB_i
    while t <= max_k:
        if Np % t == 0:
            TB_k = t
        t += TB_i
    return Np, TB_i, TB_k


def _node_network_kernel(aT_ref, a_ref, mT_src_ref, mT_tile_ref,
                         w1aT_ref, w1bT_ref, w1cT_ref, b1_ref, w2T_ref, b2_ref,
                         outT_ref, miT_acc, moT_acc):
    k = pl.program_id(1)

    @pl.when(k == 0)
    def _():
        miT_acc[...] = jnp.zeros_like(miT_acc)
        moT_acc[...] = jnp.zeros_like(moT_acc)

    mT_k = mT_src_ref[...]                                    # (D8, TB_k)

    # mi^T[:, i-tile] += m^T[:, k-blk] @ A^T[k-blk, i-blk]     (plain MXU dot)
    miT_acc[...] += jnp.dot(mT_k, aT_ref[...],
                            preferred_element_type=jnp.float32)
    # mo^T[:, i-tile] += m^T[:, k-blk] @ A[k-blk, i-blk]
    moT_acc[...] += jnp.dot(mT_k, a_ref[...],
                            preferred_element_type=jnp.float32)

    @pl.when(k == pl.num_programs(1) - 1)
    def _():
        # nodec MLP in the transposed domain:
        #   h^T   = tanh(W1a^T @ mi^T + W1b^T @ mo^T + W1c^T @ m^T + b1^T)
        #   out^T = tanh(W2^T @ h^T + b2^T)
        # (concat([mi, mo, m]) @ W1 folded into the three D-blocks of W1.)
        hT = jnp.tanh(
            jnp.dot(w1aT_ref[...], miT_acc[...],
                    preferred_element_type=jnp.float32)
            + jnp.dot(w1bT_ref[...], moT_acc[...],
                      preferred_element_type=jnp.float32)
            + jnp.dot(w1cT_ref[...], mT_tile_ref[...].astype(jnp.float32),
                      preferred_element_type=jnp.float32)
            + b1_ref[...]
        )
        outT_ref[...] = jnp.tanh(
            jnp.dot(w2T_ref[...], hT, preferred_element_type=jnp.float32)
            + b2_ref[...]
        )


def prepare_graph(edge_index, edge_attr, num_nodes, *, tile_i=256, tile_k=2048,
                  matmul_dtype=jnp.float32):
    """Per-graph operands.  Hoist this out of the per-layer call when the same
    graph (edge_index/edge_attr) is reused across message-passing iterations."""
    Np, TB_i, TB_k = _tiling(num_nodes, tile_i, tile_k)
    row = edge_index[0].astype(jnp.int32)
    col = edge_index[1].astype(jnp.int32)
    ea = edge_attr.reshape(-1).astype(jnp.float32)
    # A[col_e, row_e] += ea_e   =>   mi = A @ m,   mo = A^T @ m   (exact).
    A = jnp.zeros((Np, Np), jnp.float32).at[col, row].add(ea)
    return {
        "Np": Np, "TB_i": TB_i, "TB_k": TB_k,
        "A": A.astype(matmul_dtype),
        # A^T built once here so the mi path is a plain jnp.dot in the kernel.
        "A_T": A.T.astype(matmul_dtype),
    }


def prepare_params(params, input_dim):
    """Pad/split/transpose nodec weights.  Hoist when params are reused."""
    D = input_dim
    H = params["b1"].shape[-1]
    D8 = _round_up(D, 8)          # feature dim lives on sublanes now
    Hp = _round_up(H, 128)
    W1 = params["W1"].astype(jnp.float32)                     # (3D, H)
    zw = lambda: jnp.zeros((Hp, D8), jnp.float32)
    return {
        "D": D, "H": H, "D8": D8, "Hp": Hp,
        "w1aT": zw().at[:H, :D].set(W1[0 * D:1 * D].T),
        "w1bT": zw().at[:H, :D].set(W1[1 * D:2 * D].T),
        "w1cT": zw().at[:H, :D].set(W1[2 * D:3 * D].T),
        "b1": jnp.zeros((Hp, 1), jnp.float32).at[:H, 0].set(
            params["b1"].reshape(-1).astype(jnp.float32)),
        "w2T": jnp.zeros((Hp, Hp), jnp.float32).at[:H, :H].set(
            params["W2"].astype(jnp.float32).T),
        "b2": jnp.zeros((Hp, 1), jnp.float32).at[:H, 0].set(
            params["b2"].reshape(-1).astype(jnp.float32)),
    }


def node_network(m, edge_index, edge_attr, params, *, tile_i=256, tile_k=2048,
                 matmul_dtype=jnp.float32, graph=None, packed_params=None):
    """m: (N, D) f32; edge_index: (2, E) int; edge_attr: (E, 1) f32.
    params: W1 (3D, H), b1 (1, H), W2 (H, H), b2 (1, H)  with y = x @ W + b."""
    N, D = m.shape
    if graph is None:
        graph = prepare_graph(edge_index, edge_attr, N, tile_i=tile_i,
                              tile_k=tile_k, matmul_dtype=matmul_dtype)
    if packed_params is None:
        packed_params = prepare_params(params, D)

    Np, TB_i, TB_k = graph["Np"], graph["TB_i"], graph["TB_k"]
    D8, Hp, H = packed_params["D8"], packed_params["Hp"], packed_params["H"]

    # Node features stored transposed: feature dim on sublanes, nodes on lanes.
    mT = jnp.zeros((D8, Np), jnp.float32).at[:D, :N].set(
        m.astype(jnp.float32).T).astype(matmul_dtype)

    n_i = Np // TB_i
    n_k = Np // TB_k
    const = lambda i, k: (0, 0)

    grid_spec = pltpu.PrefetchScalarGridSpec(
        num_scalar_prefetch=0,
        grid=(n_i, n_k),                     # (node tiles [parallel], contraction [arbitrary])
        in_specs=[
            pl.BlockSpec((TB_k, TB_i), lambda i, k: (k, i)),   # A^T block (mi path)
            pl.BlockSpec((TB_k, TB_i), lambda i, k: (k, i)),   # A   block (mo path)
            pl.BlockSpec((D8, TB_k), lambda i, k: (0, k)),     # m^T contraction slab
            pl.BlockSpec((D8, TB_i), lambda i, k: (0, i)),     # m^T of this node tile
            pl.BlockSpec((Hp, D8), const),                     # W1[:D]^T
            pl.BlockSpec((Hp, D8), const),                     # W1[D:2D]^T
            pl.BlockSpec((Hp, D8), const),                     # W1[2D:]^T
            pl.BlockSpec((Hp, 1), const),                      # b1^T
            pl.BlockSpec((Hp, Hp), const),                     # W2^T
            pl.BlockSpec((Hp, 1), const),                      # b2^T
        ],
        out_specs=pl.BlockSpec((Hp, TB_i), lambda i, k: (0, i)),
        scratch_shapes=[
            pltpu.VMEM((D8, TB_i), jnp.float32),               # mi^T accumulator
            pltpu.VMEM((D8, TB_i), jnp.float32),               # mo^T accumulator
        ],
    )

    a_item = jnp.dtype(matmul_dtype).itemsize
    cost = pl.CostEstimate(
        flops=4 * D8 * Np * Np + Np * (6 * Hp * D8 + 2 * Hp * Hp),
        transcendentals=2 * Np * Hp,
        bytes_accessed=(2 * Np * Np + D8 * Np * (n_i + 1)) * a_item
                       + 4 * (3 * Hp * D8 + Hp * Hp + 2 * Hp + Hp * Np),
    )

    outT = pl.pallas_call(
        _node_network_kernel,
        out_shape=jax.ShapeDtypeStruct((Hp, Np), jnp.float32),
        grid_spec=grid_spec,
        compiler_params=pltpu.CompilerParams(
            dimension_semantics=("parallel", "arbitrary"),
            # ~9 MiB/step at the default tiles; 48 MiB leaves headroom on v7x
            # (64 MiB/TC) and is above the 32 MiB default on v5e/v6e.
            vmem_limit_bytes=48 * 1024 * 1024,
        ),
        cost_estimate=cost,
    )(graph["A_T"], graph["A"], mT, mT,
      packed_params["w1aT"], packed_params["w1bT"], packed_params["w1cT"],
      packed_params["b1"], packed_params["w2T"], packed_params["b2"])

    # One wrapper-side transpose back to (N, H); padded rows/cols sliced off.
    return outT[:H, :N].T


def ref_forward(m, edge_index, edge_attr, params):
    """Pure-JAX reference mirroring the PyTorch forward."""
    row, col = edge_index
    mi = jnp.zeros_like(m).at[col].add(edge_attr * m[row])
    mo = jnp.zeros_like(m).at[row].add(edge_attr * m[col])
    M = jnp.concatenate([mi, mo, m], axis=-1)
    h = jnp.tanh(M @ params["W1"] + params["b1"])
    return jnp.tanh(h @ params["W2"] + params["b2"])


if __name__ == "__main__":
    # Small shapes consistent with the module (benchmark at production N/E,
    # not here — these sizes are overhead-dominated).
    N = 16           # number of nodes
    input_dim = 8    # D: per-node feature dim (data.m is (N, D))
    E = 32           # number of edges
    output_dim = 32  # H

    key = jax.random.PRNGKey(0)
    k_m, k_ea, k_row, k_col, k_w1, k_b1, k_w2, k_b2 = jax.random.split(key, 8)

    m = jax.random.normal(k_m, (N, input_dim), dtype=jnp.float32)
    edge_attr = jax.random.normal(k_ea, (E, 1), dtype=jnp.float32)
    row = jax.random.randint(k_row, (E,), 0, N, dtype=jnp.int32)
    col = jax.random.randint(k_col, (E,), 0, N, dtype=jnp.int32)
    edge_index = jnp.stack([row, col], axis=0)        # (2, E)

    # PyTorch Linear params stored transposed as (in, out) so y = x @ W + b.
    in1 = input_dim * 3
    bound1 = 1.0 / np.sqrt(in1)
    bound2 = 1.0 / np.sqrt(output_dim)
    params = {
        "W1": jax.random.uniform(k_w1, (in1, output_dim), jnp.float32, -bound1, bound1),
        "b1": jax.random.uniform(k_b1, (1, output_dim), jnp.float32, -bound1, bound1),
        "W2": jax.random.uniform(k_w2, (output_dim, output_dim), jnp.float32, -bound2, bound2),
        "b2": jax.random.uniform(k_b2, (1, output_dim), jnp.float32, -bound2, bound2),
    }

    out = node_network(m, edge_index, edge_attr, params)
    out = jax.block_until_ready(out)

    expected = ref_forward(m, edge_index, edge_attr, params)
    np.testing.assert_allclose(np.asarray(out), np.asarray(expected),
                               rtol=1e-5, atol=1e-5)
    print("KERNEL_OK")
</pallas_src>

<mosaic_0001>
module attributes {stable_mosaic.version = 11 : i64} {
  func.func @_node_network_kernel(%arg0: i32, %arg1: i32, %arg2: memref<128x128xf32, #tpu.memory_space<vmem>>, %arg3: memref<128x128xf32, #tpu.memory_space<vmem>>, %arg4: memref<8x128xf32, #tpu.memory_space<vmem>>, %arg5: memref<8x128xf32, #tpu.memory_space<vmem>>, %arg6: memref<128x8xf32, #tpu.memory_space<vmem>>, %arg7: memref<128x8xf32, #tpu.memory_space<vmem>>, %arg8: memref<128x8xf32, #tpu.memory_space<vmem>>, %arg9: memref<128x1xf32, #tpu.memory_space<vmem>>, %arg10: memref<128x128xf32, #tpu.memory_space<vmem>>, %arg11: memref<128x1xf32, #tpu.memory_space<vmem>>, %arg12: memref<128x128xf32, #tpu.memory_space<vmem>>, %arg13: memref<8x128xf32, #tpu.memory_space<vmem>>, %arg14: memref<8x128xf32, #tpu.memory_space<vmem>>) attributes {dimension_semantics = [#tpu.dimension_semantics<parallel>, #tpu.dimension_semantics<arbitrary>], iteration_bounds = array<i64: 1, 1>, scalar_prefetch = 0 : i64, scratch_operands = 2 : i64, tpu.core_type = #tpu.core_type<tc>, window_params = [{transform_indices = @transform_0, window_bounds = array<i64: 128, 128>}, {transform_indices = @transform_1, window_bounds = array<i64: 128, 128>}, {transform_indices = @transform_2, window_bounds = array<i64: 8, 128>}, {transform_indices = @transform_3, window_bounds = array<i64: 8, 128>}, {pipeline_mode = #tpu.pipeline_mode<synchronous>, transform_indices = @transform_4, window_bounds = array<i64: 128, 8>}, {pipeline_mode = #tpu.pipeline_mode<synchronous>, transform_indices = @transform_5, window_bounds = array<i64: 128, 8>}, {pipeline_mode = #tpu.pipeline_mode<synchronous>, transform_indices = @transform_6, window_bounds = array<i64: 128, 8>}, {pipeline_mode = #tpu.pipeline_mode<synchronous>, transform_indices = @transform_7, window_bounds = array<i64: 128, 1>}, {pipeline_mode = #tpu.pipeline_mode<synchronous>, transform_indices = @transform_8, window_bounds = array<i64: 128, 128>}, {pipeline_mode = #tpu.pipeline_mode<synchronous>, transform_indices = @transform_9, window_bounds = array<i64: 128, 1>}, {transform_indices = @transform_10, window_bounds = array<i64: 128, 128>}]} {
    %c0_i32 = arith.constant 0 : i32
    %0 = arith.cmpi eq, %arg1, %c0_i32 : i32
    %1 = arith.extui %0 : i1 to i32
    %c0_i32_0 = arith.constant 0 : i32
    %2 = arith.cmpi ne, %1, %c0_i32_0 : i32
    scf.if %2 {
      %cst_17 = arith.constant 0.000000e+00 : f32
      %17 = vector.broadcast %cst_17 : f32 to vector<8x128xf32>
      %c0_18 = arith.constant 0 : index
      %c0_19 = arith.constant 0 : index
      %18 = vector.load %arg13[%c0_18, %c0_19] : memref<8x128xf32, #tpu.memory_space<vmem>>, vector<8x128xf32>
      tpu.vector_store %arg13[%c0_18, %c0_19], %17 {strides = array<i32>} : memref<8x128xf32, #tpu.memory_space<vmem>>, vector<8x128xf32>,
      %cst_20 = arith.constant 0.000000e+00 : f32
      %19 = vector.broadcast %cst_20 : f32 to vector<8x128xf32>
      %c0_21 = arith.constant 0 : index
      %c0_22 = arith.constant 0 : index
      %20 = vector.load %arg14[%c0_21, %c0_22] : memref<8x128xf32, #tpu.memory_space<vmem>>, vector<8x128xf32>
      tpu.vector_store %arg14[%c0_21, %c0_22], %19 {strides = array<i32>} : memref<8x128xf32, #tpu.memory_space<vmem>>, vector<8x128xf32>,
    } else {
    }
    %c0 = arith.constant 0 : index
    %c0_1 = arith.constant 0 : index
    %3 = vector.load %arg4[%c0, %c0_1] : memref<8x128xf32, #tpu.memory_space<vmem>>, vector<8x128xf32>
    %c0_2 = arith.constant 0 : index
    %c0_3 = arith.constant 0 : index
    %4 = vector.load %arg13[%c0_2, %c0_3] : memref<8x128xf32, #tpu.memory_space<vmem>>, vector<8x128xf32>
    %c0_4 = arith.constant 0 : index
    %c0_5 = arith.constant 0 : index
    %5 = vector.load %arg2[%c0_4, %c0_5] : memref<128x128xf32, #tpu.memory_space<vmem>>, vector<128x128xf32>
    %cst = arith.constant dense<0.000000e+00> : vector<8x128xf32>
    %6 = tpu.matmul %3, %5, %cst {dimension_numbers = #tpu.dot_dimension_numbers<[1], [0], [0], [1], [0, 0, 1, 1], [], []>} : vector<8x128xf32>, vector<128x128xf32>, vector<8x128xf32> -> vector<8x128xf32>
    %7 = arith.addf %4, %6 : vector<8x128xf32>
    %c0_6 = arith.constant 0 : index
    %c0_7 = arith.constant 0 : index
    %8 = vector.load %arg13[%c0_6, %c0_7] : memref<8x128xf32, #tpu.memory_space<vmem>>, vector<8x128xf32>
    tpu.vector_store %arg13[%c0_6, %c0_7], %7 {strides = array<i32>} : memref<8x128xf32, #tpu.memory_space<vmem>>, vector<8x128xf32>,
    %c0_8 = arith.constant 0 : index
    %c0_9 = arith.constant 0 : index
    %9 = vector.load %arg14[%c0_8, %c0_9] : memref<8x128xf32, #tpu.memory_space<vmem>>, vector<8x128xf32>
    %c0_10 = arith.constant 0 : index
    %c0_11 = arith.constant 0 : index
    %10 = vector.load %arg3[%c0_10, %c0_11] : memref<128x128xf32, #tpu.memory_space<vmem>>, vector<128x128xf32>
    %cst_12 = arith.constant dense<0.000000e+00> : vector<8x128xf32>
    %11 = tpu.matmul %3, %10, %cst_12 {dimension_numbers = #tpu.dot_dimension_numbers<[1], [0], [0], [1], [0, 0, 1, 1], [], []>} : vector<8x128xf32>, vector<128x128xf32>, vector<8x128xf32> -> vector<8x128xf32>
    %12 = arith.addf %9, %11 : vector<8x128xf32>
    %c0_13 = arith.constant 0 : index
    %c0_14 = arith.constant 0 : index
    %13 = vector.load %arg14[%c0_13, %c0_14] : memref<8x128xf32, #tpu.memory_space<vmem>>, vector<8x128xf32>
    tpu.vector_store %arg14[%c0_13, %c0_14], %12 {strides = array<i32>} : memref<8x128xf32, #tpu.memory_space<vmem>>, vector<8x128xf32>,
    %c0_i32_15 = arith.constant 0 : i32
    %14 = arith.cmpi eq, %arg1, %c0_i32_15 : i32
    %15 = arith.extui %14 : i1 to i32
    %c0_i32_16 = arith.constant 0 : i32
    %16 = arith.cmpi ne, %15, %c0_i32_16 : i32
    scf.if %16 {
      %c0_17 = arith.constant 0 : index
      %c0_18 = arith.constant 0 : index
      %17 = vector.load %arg6[%c0_17, %c0_18] : memref<128x8xf32, #tpu.memory_space<vmem>>, vector<128x8xf32>
      %c0_19 = arith.constant 0 : index
      %c0_20 = arith.constant 0 : index
      %18 = vector.load %arg13[%c0_19, %c0_20] : memref<8x128xf32, #tpu.memory_space<vmem>>, vector<8x128xf32>
      %cst_21 = arith.constant dense<0.000000e+00> : vector<128x128xf32>
      %19 = tpu.matmul %17, %18, %cst_21 {dimension_numbers = #tpu.dot_dimension_numbers<[1], [0], [0], [1], [0, 0, 1, 1], [], []>} : vector<128x8xf32>, vector<8x128xf32>, vector<128x128xf32> -> vector<128x128xf32>
      %c0_22 = arith.constant 0 : index
      %c0_23 = arith.constant 0 : index
      %20 = vector.load %arg7[%c0_22, %c0_23] : memref<128x8xf32, #tpu.memory_space<vmem>>, vector<128x8xf32>
      %c0_24 = arith.constant 0 : index
      %c0_25 = arith.constant 0 : index
      %21 = vector.load %arg14[%c0_24, %c0_25] : memref<8x128xf32, #tpu.memory_space<vmem>>, vector<8x128xf32>
      %cst_26 = arith.constant dense<0.000000e+00> : vector<128x128xf32>
      %22 = tpu.matmul %20, %21, %cst_26 {dimension_numbers = #tpu.dot_dimension_numbers<[1], [0], [0], [1], [0, 0, 1, 1], [], []>} : vector<128x8xf32>, vector<8x128xf32>, vector<128x128xf32> -> vector<128x128xf32>
      %23 = arith.addf %19, %22 : vector<128x128xf32>
      %c0_27 = arith.constant 0 : index
      %c0_28 = arith.constant 0 : index
      %24 = vector.load %arg8[%c0_27, %c0_28] : memref<128x8xf32, #tpu.memory_space<vmem>>, vector<128x8xf32>
      %c0_29 = arith.constant 0 : index
      %c0_30 = arith.constant 0 : index
      %25 = vector.load %arg5[%c0_29, %c0_30] : memref<8x128xf32, #tpu.memory_space<vmem>>, vector<8x128xf32>
      %cst_31 = arith.constant dense<0.000000e+00> : vector<128x128xf32>
      %26 = tpu.matmul %24, %25, %cst_31 {dimension_numbers = #tpu.dot_dimension_numbers<[1], [0], [0], [1], [0, 0, 1, 1], [], []>} : vector<128x8xf32>, vector<8x128xf32>, vector<128x128xf32> -> vector<128x128xf32>
      %27 = arith.addf %23, %26 : vector<128x128xf32>
      %c0_32 = arith.constant 0 : index
      %c0_33 = arith.constant 0 : index
      %28 = vector.load %arg9[%c0_32, %c0_33] : memref<128x1xf32, #tpu.memory_space<vmem>>, vector<128x1xf32>
      %29 = vector.broadcast %28 : vector<128x1xf32> to vector<128x128xf32>
      %30 = arith.addf %27, %29 : vector<128x128xf32>
      %31 = math.tanh %30 : vector<128x128xf32>
      %c0_34 = arith.constant 0 : index
      %c0_35 = arith.constant 0 : index
      %32 = vector.load %arg10[%c0_34, %c0_35] : memref<128x128xf32, #tpu.memory_space<vmem>>, vector<128x128xf32>
      %cst_36 = arith.constant dense<0.000000e+00> : vector<128x128xf32>
      %33 = tpu.matmul %32, %31, %cst_36 {dimension_numbers = #tpu.dot_dimension_numbers<[1], [0], [0], [1], [0, 0, 1, 1], [], []>} : vector<128x128xf32>, vector<128x128xf32>, vector<128x128xf32> -> vector<128x128xf32>
      %c0_37 = arith.constant 0 : index
      %c0_38 = arith.constant 0 : index
      %34 = vector.load %arg11[%c0_37, %c0_38] : memref<128x1xf32, #tpu.memory_space<vmem>>, vector<128x1xf32>
      %35 = vector.broadcast %34 : vector<128x1xf32> to vector<128x128xf32>
      %36 = arith.addf %33, %35 : vector<128x128xf32>
      %37 = math.tanh %36 : vector<128x128xf32>
      %c0_39 = arith.constant 0 : index
      %c0_40 = arith.constant 0 : index
      %38 = vector.load %arg12[%c0_39, %c0_40] : memref<128x128xf32, #tpu.memory_space<vmem>>, vector<128x128xf32>
      tpu.vector_store %arg12[%c0_39, %c0_40], %37 {strides = array<i32>} : memref<128x128xf32, #tpu.memory_space<vmem>>, vector<128x128xf32>,
    } else {
    }
    return
  }
  func.func @transform_0(%arg0: i32, %arg1: i32) -> (i32, i32) {
    %c0_i32 = arith.constant 0 : i32
    return %arg1, %arg0 : i32, i32
  }
  func.func @transform_1(%arg0: i32, %arg1: i32) -> (i32, i32) {
    %c0_i32 = arith.constant 0 : i32
    return %arg1, %arg0 : i32, i32
  }
  func.func @transform_2(%arg0: i32, %arg1: i32) -> (i32, i32) {
    %c0_i32 = arith.constant 0 : i32
    %c0_i32_0 = arith.constant 0 : i32
    return %c0_i32, %arg1 : i32, i32
  }
  func.func @transform_3(%arg0: i32, %arg1: i32) -> (i32, i32) {
    %c0_i32 = arith.constant 0 : i32
    %c0_i32_0 = arith.constant 0 : i32
    return %c0_i32, %arg0 : i32, i32
  }
  func.func @transform_4(%arg0: i32, %arg1: i32) -> (i32, i32) {
    %c0_i32 = arith.constant 0 : i32
    %c0_i32_0 = arith.constant 0 : i32
    %c0_i32_1 = arith.constant 0 : i32
    return %c0_i32, %c0_i32_0 : i32, i32
  }
  func.func @transform_5(%arg0: i32, %arg1: i32) -> (i32, i32) {
    %c0_i32 = arith.constant 0 : i32
    %c0_i32_0 = arith.constant 0 : i32
    %c0_i32_1 = arith.constant 0 : i32
    return %c0_i32, %c0_i32_0 : i32, i32
  }
  func.func @transform_6(%arg0: i32, %arg1: i32) -> (i32, i32) {
    %c0_i32 = arith.constant 0 : i32
    %c0_i32_0 = arith.constant 0 : i32
    %c0_i32_1 = arith.constant 0 : i32
    return %c0_i32, %c0_i32_0 : i32, i32
  }
  func.func @transform_7(%arg0: i32, %arg1: i32) -> (i32, i32) {
    %c0_i32 = arith.constant 0 : i32
    %c0_i32_0 = arith.constant 0 : i32
    %c0_i32_1 = arith.constant 0 : i32
    return %c0_i32, %c0_i32_0 : i32, i32
  }
  func.func @transform_8(%arg0: i32, %arg1: i32) -> (i32, i32) {
    %c0_i32 = arith.constant 0 : i32
    %c0_i32_0 = arith.constant 0 : i32
    %c0_i32_1 = arith.constant 0 : i32
    return %c0_i32, %c0_i32_0 : i32, i32
  }
  func.func @transform_9(%arg0: i32, %arg1: i32) -> (i32, i32) {
    %c0_i32 = arith.constant 0 : i32
    %c0_i32_0 = arith.constant 0 : i32
    %c0_i32_1 = arith.constant 0 : i32
    return %c0_i32, %c0_i32_0 : i32, i32
  }
  func.func @transform_10(%arg0: i32, %arg1: i32) -> (i32, i32) {
    %c0_i32 = arith.constant 0 : i32
    %c0_i32_0 = arith.constant 0 : i32
    return %c0_i32, %arg0 : i32, i32
  }
}

</mosaic_0001>

<llo_original>
// kernel: tpu_custom_call.1
$region0: #{tpu_custom_call.1}
  #allocation0 [shape = 'u32[]', space=smem, size = 0x4, offset = 0x4, fixed_abs, tag = 'smem constant byte address 0x4 - core index']
  #allocation1 [shape = 'u32[144,128]{1,0:T(1,128)}', space=vmem, size = 0x12000, scoped, tag = 'internal scratch']
  #allocation2 [shape = 'f32[8,128]{1,0:T(8,128)}', space=vmem, size = 0x1000, scoped, tag = 'scratch operand']
  #allocation3 [shape = 'f32[8,128]{1,0:T(8,128)}', space=vmem, size = 0x1000, scoped, tag = 'scratch operand']
  %s0 = inlined_call_operand.vmem [shape: f32[128,128], index: 0, kind: input, shape index: {}]
  %s1 = inlined_call_operand.vmem [shape: f32[128,128], index: 1, kind: input, shape index: {}]
  %s2 = inlined_call_operand.vmem [shape: f32[8,128], index: 2, kind: input, shape index: {}]
  %s3 = inlined_call_operand.vmem [shape: f32[8,128], index: 3, kind: input, shape index: {}]
  %s4 = inlined_call_operand.vmem [shape: f32[128,8], index: 4, kind: input, shape index: {}]
  %s5 = inlined_call_operand.vmem [shape: f32[128,8], index: 5, kind: input, shape index: {}]
  %s6 = inlined_call_operand.vmem [shape: f32[128,8], index: 6, kind: input, shape index: {}]
  %s7 = inlined_call_operand.vmem [shape: f32[128,1], index: 7, kind: input, shape index: {}]
  %s8 = inlined_call_operand.vmem [shape: f32[128,128], index: 8, kind: input, shape index: {}]
  %s9 = inlined_call_operand.vmem [shape: f32[128,1], index: 9, kind: input, shape index: {}]
  %s10 = inlined_call_operand.hbm [shape: f32[128,128], index: 10, kind: output, shape index: {}]
  %s11 = sld [smem:[#allocation0]]
  $region58: #{tpu_custom_call.1} parent=0
    _
  %s13 = ssub.s32 1, %s11
  %s14 = scalar_select 0, %s13, %s11
  $region1: #{tpu_custom_call.1} parent=0
    #allocation4 [shape = 'u8[65536]{0}', space=vmem, size = 0x10000, scoped, tag = 'output window, operand 0, single buffered']
    #allocation5 [shape = 's32[1]{0}', space=sflag, size = 0x4, scoped, tag = 'scoped memory for tpu_custom_call.1']
    %15 = vsyncpa [#allocation5], 0
    // Predicated region
    $region2: #{tpu_custom_call.1} parent=1 // pred_check
      _
    $region3: #{tpu_custom_call.1} parent=1 // pred_check_branch
      %17 = sbr.rel (0) target = $region5
    $region4: #{tpu_custom_call.1} parent=1 // pred_region
      _
    $region5: #{tpu_custom_call.1} parent=1 // pred_fallthru
      _
    // Predicated region
    $region6: #{tpu_custom_call.1} parent=1 // pred_check
      _
    $region7: #{tpu_custom_call.1} parent=1 // pred_check_branch
      %19 = sbr.rel (0) target = $region9
    $region8: #{tpu_custom_call.1} parent=1 // pred_region
      _
    $region9: #{tpu_custom_call.1} parent=1 // pred_fallthru
      _
    // Predicated region
    $region10: #{tpu_custom_call.1} parent=1 // pred_check
      _
    $region11: #{tpu_custom_call.1} parent=1 // pred_check_branch
      %21 = sbr.rel (0) target = $region13
    $region12: #{tpu_custom_call.1} parent=1 // pred_region
      _
    $region13: #{tpu_custom_call.1} parent=1 // pred_fallthru
      _
    // Predicated region
    $region14: #{tpu_custom_call.1} parent=1 // pred_check
      _
    $region15: #{tpu_custom_call.1} parent=1 // pred_check_branch
      %23 = sbr.rel (0) target = $region17
    $region16: #{tpu_custom_call.1} parent=1 // pred_region
      _
    $region17: #{tpu_custom_call.1} parent=1 // pred_fallthru
      _
    // Predicated region
    $region18: #{tpu_custom_call.1} parent=1 // pred_check
      _
    $region19: #{tpu_custom_call.1} parent=1 // pred_check_branch
      %25 = sbr.rel (0) target = $region21
    $region20: #{tpu_custom_call.1} parent=1 // pred_region
      _
    $region21: #{tpu_custom_call.1} parent=1 // pred_fallthru
      _
    // Predicated region
    $region22: #{tpu_custom_call.1} parent=1 // pred_check
      _
    $region23: #{tpu_custom_call.1} parent=1 // pred_check_branch
      %27 = sbr.rel (0) target = $region25
    $region24: #{tpu_custom_call.1} parent=1 // pred_region
      _
    $region25: #{tpu_custom_call.1} parent=1 // pred_fallthru
      _
    // Predicated region
    $region26: #{tpu_custom_call.1} parent=1 // pred_check
      _
    $region27: #{tpu_custom_call.1} parent=1 // pred_check_branch
      %29 = sbr.rel (0) target = $region29
    $region28: #{tpu_custom_call.1} parent=1 // pred_region
      _
    $region29: #{tpu_custom_call.1} parent=1 // pred_fallthru
      _
    // Predicated region
    $region30: #{tpu_custom_call.1} parent=1 // pred_check
      _
    $region31: #{tpu_custom_call.1} parent=1 // pred_check_branch
      %31 = sbr.rel (0) target = $region33
    $region32: #{tpu_custom_call.1} parent=1 // pred_region
      _
    $region33: #{tpu_custom_call.1} parent=1 // pred_fallthru
      _
    // Predicated region
    $region34: #{tpu_custom_call.1} parent=1 // pred_check
      _
    $region35: #{tpu_custom_call.1} parent=1 // pred_check_branch
      %33 = sbr.rel (0) target = $region37
    $region36: #{tpu_custom_call.1} parent=1 // pred_region
      _
    $region37: #{tpu_custom_call.1} parent=1 // pred_fallthru
      _
    // Predicated region
    $region38: #{tpu_custom_call.1} parent=1 // pred_check
      _
    $region39: #{tpu_custom_call.1} parent=1 // pred_check_branch
      %35 = sbr.rel (0) target = $region41
    $region40: #{tpu_custom_call.1} parent=1 // pred_region
      _
    $region41: #{tpu_custom_call.1} parent=1 // pred_fallthru
      _
    %p36 = scmp.eq.s32.totalorder 0, 0
    // Predicated region
    $region42: #{tpu_custom_call.1} parent=1 // pred_check
      %p37 = pneg %p36
    $region43: #{tpu_custom_call.1} parent=1 // pred_check_branch
      %39 = sbr.rel (%p37) target = $region45
    $region44: #{tpu_custom_call.1} parent=1 // pred_region
      %40 = vst [vmem:[#allocation2] sm:$0xff] 0.0
      %41 = vst [vmem:[#allocation3] sm:$0xff] 0.0
    $region45: #{tpu_custom_call.1} parent=1 // pred_fallthru
      _
    %v42 = vld [vmem:[%s2] sm:$0xff]
    %v43 = vld [vmem:[#allocation2] sm:$0xff]
    %v44 = vld [vmem:[%s0] sm:$0xff]
    %v45 = vld [vmem:[%s0 + $0x8] sm:$0xff]
    %v46 = vld [vmem:[%s0 + $0x10] sm:$0xff]
    %v47 = vld [vmem:[%s0 + $0x18] sm:$0xff]
    %v48 = vld [vmem:[%s0 + $0x20] sm:$0xff]
    %v49 = vld [vmem:[%s0 + $0x28] sm:$0xff]
    %v50 = vld [vmem:[%s0 + $0x30] sm:$0xff]
    %v51 = vld [vmem:[%s0 + $0x38] sm:$0xff]
    %v52 = vld [vmem:[%s0 + $0x40] sm:$0xff]
    %v53 = vld [vmem:[%s0 + $0x48] sm:$0xff]
    %v54 = vld [vmem:[%s0 + $0x50] sm:$0xff]
    %v55 = vld [vmem:[%s0 + $0x58] sm:$0xff]
    %v56 = vld [vmem:[%s0 + $0x60] sm:$0xff]
    %v57 = vld [vmem:[%s0 + $0x68] sm:$0xff]
    %v58 = vld [vmem:[%s0 + $0x70] sm:$0xff]
    %v59 = vld [vmem:[%s0 + $0x78] sm:$0xff]
    %60 = vmatprep.subr.mxu0 0.0
    %61 = vmatpush1.msra.mxu0 %v44
    %62 = vmatprep.subr.mxu0 0.0
    %63 = vmatpush1.msra.mxu0 %v45
    %64 = vmatprep.subr.mxu0 0.0
    %65 = vmatpush1.msra.mxu0 %v46
    %66 = vmatprep.subr.mxu0 0.0
    %67 = vmatpush1.msra.mxu0 %v47
    %68 = vmatprep.subr.mxu0 0.0
    %69 = vmatpush1.msra.mxu0 %v48
    %70 = vmatprep.subr.mxu0 0.0
    %71 = vmatpush1.msra.mxu0 %v49
    %72 = vmatprep.subr.mxu0 0.0
    %73 = vmatpush1.msra.mxu0 %v50
    %74 = vmatprep.subr.mxu0 0.0
    %75 = vmatpush1.msra.mxu0 %v51
    %76 = vmatprep.subr.mxu0 0.0
    %77 = vmatpush1.msra.mxu0 %v52
    %78 = vmatprep.subr.mxu0 0.0
    %79 = vmatpush1.msra.mxu0 %v53
    %80 = vmatprep.subr.mxu0 0.0
    %81 = vmatpush1.msra.mxu0 %v54
    %82 = vmatprep.subr.mxu0 0.0
    %83 = vmatpush1.msra.mxu0 %v55
    %84 = vmatprep.subr.mxu0 0.0
    %85 = vmatpush1.msra.mxu0 %v56
    %86 = vmatprep.subr.mxu0 0.0
    %87 = vmatpush1.msra.mxu0 %v57
    %88 = vmatprep.subr.mxu0 0.0
    %89 = vmatpush1.msra.mxu0 %v58
    %90 = vmatprep.subr.mxu0 0.0
    %91 = vmatpush1.msra.mxu0 %v59
    %92 = vmatprep.subr.mxu0 0.0
    %93 = vmatpush1.msra.mxu0 0.0
    %94 = vmatprep.subr.mxu0 0.0
    %95 = vmatpush1.msra.mxu0 0.0
    %96 = vmatprep.subr.mxu0 0.0
    %97 = vmatpush1.msra.mxu0 0.0
    %98 = vmatprep.subr.mxu0 0.0
    %99 = vmatpush1.msra.mxu0 0.0
    %100 = vmatprep.subr.mxu0 0.0
    %101 = vmatpush1.msra.mxu0 0.0
    %102 = vmatprep.subr.mxu0 0.0
    %103 = vmatpush1.msra.mxu0 0.0
    %104 = vmatprep.subr.mxu0 0.0
    %105 = vmatpush1.msra.mxu0 0.0
    %106 = vmatprep.subr.mxu0 0.0
    %107 = vmatpush1.msra.mxu0 0.0
    %108 = vmatprep.subr.mxu0 0.0
    %109 = vmatpush1.msra.mxu0 0.0
    %110 = vmatprep.subr.mxu0 0.0
    %111 = vmatpush1.msra.mxu0 0.0
    %112 = vmatprep.subr.mxu0 0.0
    %113 = vmatpush1.msra.mxu0 0.0
    %114 = vmatprep.subr.mxu0 0.0
    %115 = vmatpush1.msra.mxu0 0.0
    %116 = vmatprep.subr.mxu0 0.0
    %117 = vmatpush1.msra.mxu0 0.0
    %118 = vmatprep.subr.mxu0 0.0
    %119 = vmatpush1.msra.mxu0 0.0
    %120 = vmatprep.subr.mxu0 0.0
    %121 = vmatpush1.msra.mxu0 0.0
    %122 = vmatprep.subr.mxu0 0.0
    %123 = vmatpush1.msra.mxu0 0.0
    %124 = vmatprep.mubr.f32.mxu0 0.0
    %125 = vmatmul.mubr.f32.gmra.mrb[0].mxu0 %v42
    %v126 = vpop.f32.mrb[0].mxu0
    %v127 = vadd.f32 0.0, %v126
    %v128 = vpop.f32.mrb[0].mxu0
    %129 = vdwg.mxu0
    %v130 = vadd.f32 %v43, %v127
    %131 = vst [vmem:[#allocation2] sm:$0xff] %v130
    %v132 = vld [vmem:[#allocation3] sm:$0xff]
    %v133 = vld [vmem:[%s1] sm:$0xff]
    %v134 = vld [vmem:[%s1 + $0x8] sm:$0xff]
    %v135 = vld [vmem:[%s1 + $0x10] sm:$0xff]
    %v136 = vld [vmem:[%s1 + $0x18] sm:$0xff]
    %v137 = vld [vmem:[%s1 + $0x20] sm:$0xff]
    %v138 = vld [vmem:[%s1 + $0x28] sm:$0xff]
    %v139 = vld [vmem:[%s1 + $0x30] sm:$0xff]
    %v140 = vld [vmem:[%s1 + $0x38] sm:$0xff]
    %v141 = vld [vmem:[%s1 + $0x40] sm:$0xff]
    %v142 = vld [vmem:[%s1 + $0x48] sm:$0xff]
    %v143 = vld [vmem:[%s1 + $0x50] sm:$0xff]
    %v144 = vld [vmem:[%s1 + $0x58] sm:$0xff]
    %v145 = vld [vmem:[%s1 + $0x60] sm:$0xff]
    %v146 = vld [vmem:[%s1 + $0x68] sm:$0xff]
    %v147 = vld [vmem:[%s1 + $0x70] sm:$0xff]
    %v148 = vld [vmem:[%s1 + $0x78] sm:$0xff]
    %149 = vmatprep.subr.mxu0 0.0
    %150 = vmatpush1.msra.mxu0 %v133
    %151 = vmatprep.subr.mxu0 0.0
    %152 = vmatpush1.msra.mxu0 %v134
    %153 = vmatprep.subr.mxu0 0.0
    %154 = vmatpush1.msra.mxu0 %v135
    %155 = vmatprep.subr.mxu0 0.0
    %156 = vmatpush1.msra.mxu0 %v136
    %157 = vmatprep.subr.mxu0 0.0
    %158 = vmatpush1.msra.mxu0 %v137
    %159 = vmatprep.subr.mxu0 0.0
    %160 = vmatpush1.msra.mxu0 %v138
    %161 = vmatprep.subr.mxu0 0.0
    %162 = vmatpush1.msra.mxu0 %v139
    %163 = vmatprep.subr.mxu0 0.0
    %164 = vmatpush1.msra.mxu0 %v140
    %165 = vmatprep.subr.mxu0 0.0
    %166 = vmatpush1.msra.mxu0 %v141
    %167 = vmatprep.subr.mxu0 0.0
    %168 = vmatpush1.msra.mxu0 %v142
    %169 = vmatprep.subr.mxu0 0.0
    %170 = vmatpush1.msra.mxu0 %v143
    %171 = vmatprep.subr.mxu0 0.0
    %172 = vmatpush1.msra.mxu0 %v144
    %173 = vmatprep.subr.mxu0 0.0
    %174 = vmatpush1.msra.mxu0 %v145
    %175 = vmatprep.subr.mxu0 0.0
    %176 = vmatpush1.msra.mxu0 %v146
    %177 = vmatprep.subr.mxu0 0.0
    %178 = vmatpush1.msra.mxu0 %v147
    %179 = vmatprep.subr.mxu0 0.0
    %180 = vmatpush1.msra.mxu0 %v148
    %181 = vmatprep.subr.mxu0 0.0
    %182 = vmatpush1.msra.mxu0 0.0
    %183 = vmatprep.subr.mxu0 0.0
    %184 = vmatpush1.msra.mxu0 0.0
    %185 = vmatprep.subr.mxu0 0.0
    %186 = vmatpush1.msra.mxu0 0.0
    %187 = vmatprep.subr.mxu0 0.0
    %188 = vmatpush1.msra.mxu0 0.0
    %189 = vmatprep.subr.mxu0 0.0
    %190 = vmatpush1.msra.mxu0 0.0
    %191 = vmatprep.subr.mxu0 0.0
    %192 = vmatpush1.msra.mxu0 0.0
    %193 = vmatprep.subr.mxu0 0.0
    %194 = vmatpush1.msra.mxu0 0.0
    %195 = vmatprep.subr.mxu0 0.0
    %196 = vmatpush1.msra.mxu0 0.0
    %197 = vmatprep.subr.mxu0 0.0
    %198 = vmatpush1.msra.mxu0 0.0
    %199 = vmatprep.subr.mxu0 0.0
    %200 = vmatpush1.msra.mxu0 0.0
    %201 = vmatprep.subr.mxu0 0.0
    %202 = vmatpush1.msra.mxu0 0.0
    %203 = vmatprep.subr.mxu0 0.0
    %204 = vmatpush1.msra.mxu0 0.0
    %205 = vmatprep.subr.mxu0 0.0
    %206 = vmatpush1.msra.mxu0 0.0
    %207 = vmatprep.subr.mxu0 0.0
    %208 = vmatpush1.msra.mxu0 0.0
    %209 = vmatprep.subr.mxu0 0.0
    %210 = vmatpush1.msra.mxu0 0.0
    %211 = vmatprep.subr.mxu0 0.0
    %212 = vmatpush1.msra.mxu0 0.0
    %213 = vmatprep.mubr.f32.mxu0 0.0
    %214 = vmatmul.mubr.f32.gmra.mrb[0].mxu0 %v42
    %v215 = vpop.f32.mrb[0].mxu0
    %v216 = vadd.f32 0.0, %v215
    %v217 = vpop.f32.mrb[0].mxu0
    %218 = vdwg.mxu0
    %v219 = vadd.f32 %v132, %v216
    %220 = vst [vmem:[#allocation3] sm:$0xff] %v219
    // Predicated region
    $region46: #{tpu_custom_call.1} parent=1 // pred_check
      %p221 = pneg %p36
    $region47: #{tpu_custom_call.1} parent=1 // pred_check_branch
      %223 = sbr.rel (%p221) target = $region49
    $region48: #{tpu_custom_call.1} parent=1 // pred_region
      %v224 = vld [vmem:[%s4] sm:$0xff]
      %v225 = vld [vmem:[%s4 + $0x8] sm:$0xff]
      %v226 = vld [vmem:[%s4 + $0x10] sm:$0xff]
      %v227 = vld [vmem:[%s4 + $0x18] sm:$0xff]
      %v228 = vld [vmem:[%s4 + $0x20] sm:$0xff]
      %v229 = vld [vmem:[%s4 + $0x28] sm:$0xff]
      %v230 = vld [vmem:[%s4 + $0x30] sm:$0xff]
      %v231 = vld [vmem:[%s4 + $0x38] sm:$0xff]
      %v232 = vld [vmem:[%s4 + $0x40] sm:$0xff]
      %v233 = vld [vmem:[%s4 + $0x48] sm:$0xff]
      %v234 = vld [vmem:[%s4 + $0x50] sm:$0xff]
      %v235 = vld [vmem:[%s4 + $0x58] sm:$0xff]
      %v236 = vld [vmem:[%s4 + $0x60] sm:$0xff]
      %v237 = vld [vmem:[%s4 + $0x68] sm:$0xff]
      %v238 = vld [vmem:[%s4 + $0x70] sm:$0xff]
      %v239 = vld [vmem:[%s4 + $0x78] sm:$0xff]
      %v240 = vld [vmem:[#allocation2] sm:$0xff]
      %v241 = vld [vmem:[%s5] sm:$0xff]
      %v242 = vld [vmem:[%s5 + $0x8] sm:$0xff]
      %v243 = vld [vmem:[%s5 + $0x10] sm:$0xff]
      %v244 = vld [vmem:[%s5 + $0x18] sm:$0xff]
      %v245 = vld [vmem:[%s5 + $0x20] sm:$0xff]
      %v246 = vld [vmem:[%s5 + $0x28] sm:$0xff]
      %v247 = vld [vmem:[%s5 + $0x30] sm:$0xff]
      %v248 = vld [vmem:[%s5 + $0x38] sm:$0xff]
      %v249 = vld [vmem:[%s5 + $0x40] sm:$0xff]
      %v250 = vld [vmem:[%s5 + $0x48] sm:$0xff]
      %v251 = vld [vmem:[%s5 + $0x50] sm:$0xff]
      %v252 = vld [vmem:[%s5 + $0x58] sm:$0xff]
      %v253 = vld [vmem:[%s5 + $0x60] sm:$0xff]
      %v254 = vld [vmem:[%s5 + $0x68] sm:$0xff]
      %v255 = vld [vmem:[%s5 + $0x70] sm:$0xff]
      %v256 = vld [vmem:[%s5 + $0x78] sm:$0xff]
      %v257 = vld [vmem:[#allocation3] sm:$0xff]
      %vm258 = vcmask 64512
      %v260 = vsel %vm258, %v241, 0
      %v263 = vsel %vm258, %v242, 0
      %v266 = vsel %vm258, %v243, 0
      %v269 = vsel %vm258, %v244, 0
      %v272 = vsel %vm258, %v245, 0
      %v275 = vsel %vm258, %v246, 0
      %v278 = vsel %vm258, %v247, 0
      %v281 = vsel %vm258, %v248, 0
      %v284 = vsel %vm258, %v249, 0
      %v287 = vsel %vm258, %v250, 0
      %v290 = vsel %vm258, %v251, 0
      %v293 = vsel %vm258, %v252, 0
      %v296 = vsel %vm258, %v253, 0
      %v299 = vsel %vm258, %v254, 0
      %v302 = vsel %vm258, %v255, 0
      %v305 = vsel %vm258, %v256, 0
      %307 = vmatprep.subr.mxu0 0.0
      %308 = vmatpush1.msra.mxu0 %v257
      %309 = vmatprep.subr.mxu0 0.0
      %310 = vmatpush1.msra.mxu0 0.0
      %311 = vmatprep.subr.mxu0 0.0
      %312 = vmatpush1.msra.mxu0 0.0
      %313 = vmatprep.subr.mxu0 0.0
      %314 = vmatpush1.msra.mxu0 0.0
      %315 = vmatprep.subr.mxu0 0.0
      %316 = vmatpush1.msra.mxu0 0.0
      %317 = vmatprep.subr.mxu0 0.0
      %318 = vmatpush1.msra.mxu0 0.0
      %319 = vmatprep.subr.mxu0 0.0
      %320 = vmatpush1.msra.mxu0 0.0
      %321 = vmatprep.subr.mxu0 0.0
      %322 = vmatpush1.msra.mxu0 0.0
      %323 = vmatprep.subr.mxu0 0.0
      %324 = vmatpush1.msra.mxu0 0.0
      %325 = vmatprep.subr.mxu0 0.0
      %326 = vmatpush1.msra.mxu0 0.0
      %327 = vmatprep.subr.mxu0 0.0
      %328 = vmatpush1.msra.mxu0 0.0
      %329 = vmatprep.subr.mxu0 0.0
      %330 = vmatpush1.msra.mxu0 0.0
      %331 = vmatprep.subr.mxu0 0.0
      %332 = vmatpush1.msra.mxu0 0.0
      %333 = vmatprep.subr.mxu0 0.0
      %334 = vmatpush1.msra.mxu0 0.0
      %335 = vmatprep.subr.mxu0 0.0
      %336 = vmatpush1.msra.mxu0 0.0
      %337 = vmatprep.subr.mxu0 0.0
      %338 = vmatpush1.msra.mxu0 0.0
      %339 = vmatprep.subr.mxu0 0.0
      %340 = vmatpush1.msra.mxu0 0.0
      %341 = vmatprep.subr.mxu0 0.0
      %342 = vmatpush1.msra.mxu0 0.0
      %343 = vmatprep.subr.mxu0 0.0
      %344 = vmatpush1.msra.mxu0 0.0
      %345 = vmatprep.subr.mxu0 0.0
      %346 = vmatpush1.msra.mxu0 0.0
      %347 = vmatprep.subr.mxu0 0.0
      %348 = vmatpush1.msra.mxu0 0.0
      %349 = vmatprep.subr.mxu0 0.0
      %350 = vmatpush1.msra.mxu0 0.0
      %351 = vmatprep.subr.mxu0 0.0
      %352 = vmatpush1.msra.mxu0 0.0
      %353 = vmatprep.subr.mxu0 0.0
      %354 = vmatpush1.msra.mxu0 0.0
      %355 = vmatprep.subr.mxu0 0.0
      %356 = vmatpush1.msra.mxu0 0.0
      %357 = vmatprep.subr.mxu0 0.0
      %358 = vmatpush1.msra.mxu0 0.0
      %359 = vmatprep.subr.mxu0 0.0
      %360 = vmatpush1.msra.mxu0 0.0
      %361 = vmatprep.subr.mxu0 0.0
      %362 = vmatpush1.msra.mxu0 0.0
      %363 = vmatprep.subr.mxu0 0.0
      %364 = vmatpush1.msra.mxu0 0.0
      %365 = vmatprep.subr.mxu0 0.0
      %366 = vmatpush1.msra.mxu0 0.0
      %367 = vmatprep.subr.mxu0 0.0
      %368 = vmatpush1.msra.mxu0 0.0
      %369 = vmatprep.subr.mxu0 0.0
      %370 = vmatpush1.msra.mxu0 0.0
      %371 = vmatprep.mubr.f32.mxu0 0.0
      %372 = vmatmul.mubr.f32.gmra.mrb[0].mxu0 %v260
      %v373 = vpop.f32.mrb[0].mxu0
      %v374 = vadd.f32 0.0, %v373
      %v375 = vpop.f32.mrb[0].mxu0
      %376 = vmatprep.mubr.f32.mxu0 0.0
      %377 = vmatmul.mubr.f32.gmra.mrb[0].mxu0 %v263
      %v378 = vpop.f32.mrb[0].mxu0
      %v379 = vadd.f32 0.0, %v378
      %v380 = vpop.f32.mrb[0].mxu0
      %381 = vmatprep.mubr.f32.mxu0 0.0
      %382 = vmatmul.mubr.f32.gmra.mrb[0].mxu0 %v266
      %v383 = vpop.f32.mrb[0].mxu0
      %v384 = vadd.f32 0.0, %v383
      %v385 = vpop.f32.mrb[0].mxu0
      %386 = vmatprep.mubr.f32.mxu0 0.0
      %387 = vmatmul.mubr.f32.gmra.mrb[0].mxu0 %v269
      %v388 = vpop.f32.mrb[0].mxu0
      %v389 = vadd.f32 0.0, %v388
      %v390 = vpop.f32.mrb[0].mxu0
      %391 = vmatprep.mubr.f32.mxu0 0.0
      %392 = vmatmul.mubr.f32.gmra.mrb[0].mxu0 %v272
      %v393 = vpop.f32.mrb[0].mxu0
      %v394 = vadd.f32 0.0, %v393
      %v395 = vpop.f32.mrb[0].mxu0
      %396 = vmatprep.mubr.f32.mxu0 0.0
      %397 = vmatmul.mubr.f32.gmra.mrb[0].mxu0 %v275
      %v398 = vpop.f32.mrb[0].mxu0
      %v399 = vadd.f32 0.0, %v398
      %v400 = vpop.f32.mrb[0].mxu0
      %401 = vmatprep.mubr.f32.mxu0 0.0
      %402 = vmatmul.mubr.f32.gmra.mrb[0].mxu0 %v278
      %v403 = vpop.f32.mrb[0].mxu0
      %v404 = vadd.f32 0.0, %v403
      %v405 = vpop.f32.mrb[0].mxu0
      %406 = vmatprep.mubr.f32.mxu0 0.0
      %407 = vmatmul.mubr.f32.gmra.mrb[0].mxu0 %v281
      %v408 = vpop.f32.mrb[0].mxu0
      %v409 = vadd.f32 0.0, %v408
      %v410 = vpop.f32.mrb[0].mxu0
      %411 = vmatprep.mubr.f32.mxu0 0.0
      %412 = vmatmul.mubr.f32.gmra.mrb[0].mxu0 %v284
      %v413 = vpop.f32.mrb[0].mxu0
      %v414 = vadd.f32 0.0, %v413
      %v415 = vpop.f32.mrb[0].mxu0
      %416 = vmatprep.mubr.f32.mxu0 0.0
      %417 = vmatmul.mubr.f32.gmra.mrb[0].mxu0 %v287
      %v418 = vpop.f32.mrb[0].mxu0
      %v419 = vadd.f32 0.0, %v418
      %v420 = vpop.f32.mrb[0].mxu0
      %421 = vmatprep.mubr.f32.mxu0 0.0
      %422 = vmatmul.mubr.f32.gmra.mrb[0].mxu0 %v290
      %v423 = vpop.f32.mrb[0].mxu0
      %v424 = vadd.f32 0.0, %v423
      %v425 = vpop.f32.mrb[0].mxu0
      %426 = vmatprep.mubr.f32.mxu0 0.0
      %427 = vmatmul.mubr.f32.gmra.mrb[0].mxu0 %v293
      %v428 = vpop.f32.mrb[0].mxu0
      %v429 = vadd.f32 0.0, %v428
      %v430 = vpop.f32.mrb[0].mxu0
      %431 = vmatprep.mubr.f32.mxu0 0.0
      %432 = vmatmul.mubr.f32.gmra.mrb[0].mxu0 %v296
      %v433 = vpop.f32.mrb[0].mxu0
      %v434 = vadd.f32 0.0, %v433
      %v435 = vpop.f32.mrb[0].mxu0
      %436 = vmatprep.mubr.f32.mxu0 0.0
      %437 = vmatmul.mubr.f32.gmra.mrb[0].mxu0 %v299
      %v438 = vpop.f32.mrb[0].mxu0
      %v439 = vadd.f32 0.0, %v438
      %v440 = vpop.f32.mrb[0].mxu0
      %441 = vmatprep.mubr.f32.mxu0 0.0
      %442 = vmatmul.mubr.f32.gmra.mrb[0].mxu0 %v302
      %v443 = vpop.f32.mrb[0].mxu0
      %v444 = vadd.f32 0.0, %v443
      %v445 = vpop.f32.mrb[0].mxu0
      %446 = vmatprep.mubr.f32.mxu0 0.0
      %447 = vmatmul.mubr.f32.gmra.mrb[0].mxu0 %v305
      %v448 = vpop.f32.mrb[0].mxu0
      %v449 = vadd.f32 0.0, %v448
      %v450 = vpop.f32.mrb[0].mxu0
      %451 = vdwg.mxu0
      %v453 = vsel %vm258, %v224, 0
      %v456 = vsel %vm258, %v225, 0
      %v459 = vsel %vm258, %v226, 0
      %v462 = vsel %vm258, %v227, 0
      %v465 = vsel %vm258, %v228, 0
      %v468 = vsel %vm258, %v229, 0
      %v471 = vsel %vm258, %v230, 0
      %v474 = vsel %vm258, %v231, 0
      %v477 = vsel %vm258, %v232, 0
      %v480 = vsel %vm258, %v233, 0
      %v483 = vsel %vm258, %v234, 0
      %v486 = vsel %vm258, %v235, 0
      %v489 = vsel %vm258, %v236, 0
      %v492 = vsel %vm258, %v237, 0
      %v495 = vsel %vm258, %v238, 0
      %v498 = vsel %vm258, %v239, 0
      %500 = vmatprep.subr.mxu0 0.0
      %501 = vmatpush1.msra.mxu0 %v240
      %502 = vmatprep.subr.mxu0 0.0
      %503 = vmatpush1.msra.mxu0 0.0
      %504 = vmatprep.subr.mxu0 0.0
      %505 = vmatpush1.msra.mxu0 0.0
      %506 = vmatprep.subr.mxu0 0.0
      %507 = vmatpush1.msra.mxu0 0.0
      %508 = vmatprep.subr.mxu0 0.0
      %509 = vmatpush1.msra.mxu0 0.0
      %510 = vmatprep.subr.mxu0 0.0
      %511 = vmatpush1.msra.mxu0 0.0
      %512 = vmatprep.subr.mxu0 0.0
      %513 = vmatpush1.msra.mxu0 0.0
      %514 = vmatprep.subr.mxu0 0.0
      %515 = vmatpush1.msra.mxu0 0.0
      %516 = vmatprep.subr.mxu0 0.0
      %517 = vmatpush1.msra.mxu0 0.0
      %518 = vmatprep.subr.mxu0 0.0
      %519 = vmatpush1.msra.mxu0 0.0
      %520 = vmatprep.subr.mxu0 0.0
      %521 = vmatpush1.msra.mxu0 0.0
      %522 = vmatprep.subr.mxu0 0.0
      %523 = vmatpush1.msra.mxu0 0.0
      %524 = vmatprep.subr.mxu0 0.0
      %525 = vmatpush1.msra.mxu0 0.0
      %526 = vmatprep.subr.mxu0 0.0
      %527 = vmatpush1.msra.mxu0 0.0
      %528 = vmatprep.subr.mxu0 0.0
      %529 = vmatpush1.msra.mxu0 0.0
      %530 = vmatprep.subr.mxu0 0.0
      %531 = vmatpush1.msra.mxu0 0.0
      %532 = vmatprep.subr.mxu0 0.0
      %533 = vmatpush1.msra.mxu0 0.0
      %534 = vmatprep.subr.mxu0 0.0
      %535 = vmatpush1.msra.mxu0 0.0
      %536 = vmatprep.subr.mxu0 0.0
      %537 = vmatpush1.msra.mxu0 0.0
      %538 = vmatprep.subr.mxu0 0.0
      %539 = vmatpush1.msra.mxu0 0.0
      %540 = vmatprep.subr.mxu0 0.0
      %541 = vmatpush1.msra.mxu0 0.0
      %542 = vmatprep.subr.mxu0 0.0
      %543 = vmatpush1.msra.mxu0 0.0
      %544 = vmatprep.subr.mxu0 0.0
      %545 = vmatpush1.msra.mxu0 0.0
      %546 = vmatprep.subr.mxu0 0.0
      %547 = vmatpush1.msra.mxu0 0.0
      %548 = vmatprep.subr.mxu0 0.0
      %549 = vmatpush1.msra.mxu0 0.0
      %550 = vmatprep.subr.mxu0 0.0
      %551 = vmatpush1.msra.mxu0 0.0
      %552 = vmatprep.subr.mxu0 0.0
      %553 = vmatpush1.msra.mxu0 0.0
      %554 = vmatprep.subr.mxu0 0.0
      %555 = vmatpush1.msra.mxu0 0.0
      %556 = vmatprep.subr.mxu0 0.0
      %557 = vmatpush1.msra.mxu0 0.0
      %558 = vmatprep.subr.mxu0 0.0
      %559 = vmatpush1.msra.mxu0 0.0
      %560 = vmatprep.subr.mxu0 0.0
      %561 = vmatpush1.msra.mxu0 0.0
      %562 = vmatprep.subr.mxu0 0.0
      %563 = vmatpush1.msra.mxu0 0.0
      %564 = vmatprep.mubr.f32.mxu0 0.0
      %565 = vmatmul.mubr.f32.gmra.mrb[0].mxu0 %v453
      %v566 = vpop.f32.mrb[0].mxu0
      %v567 = vadd.f32 %v374, %v566
      %v568 = vpop.f32.mrb[0].mxu0
      %569 = vmatprep.mubr.f32.mxu0 0.0
      %570 = vmatmul.mubr.f32.gmra.mrb[0].mxu0 %v456
      %v571 = vpop.f32.mrb[0].mxu0
      %v572 = vadd.f32 %v379, %v571
      %v573 = vpop.f32.mrb[0].mxu0
      %574 = vmatprep.mubr.f32.mxu0 0.0
      %575 = vmatmul.mubr.f32.gmra.mrb[0].mxu0 %v459
      %v576 = vpop.f32.mrb[0].mxu0
      %v577 = vadd.f32 %v384, %v576
      %v578 = vpop.f32.mrb[0].mxu0
      %579 = vmatprep.mubr.f32.mxu0 0.0
      %580 = vmatmul.mubr.f32.gmra.mrb[0].mxu0 %v462
      %v581 = vpop.f32.mrb[0].mxu0
      %v582 = vadd.f32 %v389, %v581
      %v583 = vpop.f32.mrb[0].mxu0
      %584 = vmatprep.mubr.f32.mxu0 0.0
      %585 = vmatmul.mubr.f32.gmra.mrb[0].mxu0 %v465
      %v586 = vpop.f32.mrb[0].mxu0
      %v587 = vadd.f32 %v394, %v586
      %v588 = vpop.f32.mrb[0].mxu0
      %589 = vmatprep.mubr.f32.mxu0 0.0
      %590 = vmatmul.mubr.f32.gmra.mrb[0].mxu0 %v468
      %v591 = vpop.f32.mrb[0].mxu0
      %v592 = vadd.f32 %v399, %v591
      %v593 = vpop.f32.mrb[0].mxu0
      %594 = vmatprep.mubr.f32.mxu0 0.0
      %595 = vmatmul.mubr.f32.gmra.mrb[0].mxu0 %v471
      %v596 = vpop.f32.mrb[0].mxu0
      %v597 = vadd.f32 %v404, %v596
      %v598 = vpop.f32.mrb[0].mxu0
      %599 = vmatprep.mubr.f32.mxu0 0.0
      %600 = vmatmul.mubr.f32.gmra.mrb[0].mxu0 %v474
      %v601 = vpop.f32.mrb[0].mxu0
      %v602 = vadd.f32 %v409, %v601
      %v603 = vpop.f32.mrb[0].mxu0
      %604 = vmatprep.mubr.f32.mxu0 0.0
      %605 = vmatmul.mubr.f32.gmra.mrb[0].mxu0 %v477
      %v606 = vpop.f32.mrb[0].mxu0
      %v607 = vadd.f32 %v414, %v606
      %v608 = vpop.f32.mrb[0].mxu0
      %609 = vmatprep.mubr.f32.mxu0 0.0
      %610 = vmatmul.mubr.f32.gmra.mrb[0].mxu0 %v480
      %v611 = vpop.f32.mrb[0].mxu0
      %v612 = vadd.f32 %v419, %v611
      %v613 = vpop.f32.mrb[0].mxu0
      %614 = vmatprep.mubr.f32.mxu0 0.0
      %615 = vmatmul.mubr.f32.gmra.mrb[0].mxu0 %v483
      %v616 = vpop.f32.mrb[0].mxu0
      %v617 = vadd.f32 %v424, %v616
      %v618 = vpop.f32.mrb[0].mxu0
      %619 = vmatprep.mubr.f32.mxu0 0.0
      %620 = vmatmul.mubr.f32.gmra.mrb[0].mxu0 %v486
      %v621 = vpop.f32.mrb[0].mxu0
      %v622 = vadd.f32 %v429, %v621
      %v623 = vpop.f32.mrb[0].mxu0
      %624 = vmatprep.mubr.f32.mxu0 0.0
      %625 = vmatmul.mubr.f32.gmra.mrb[0].mxu0 %v489
      %v626 = vpop.f32.mrb[0].mxu0
      %v627 = vadd.f32 %v434, %v626
      %v628 = vpop.f32.mrb[0].mxu0
      %629 = vmatprep.mubr.f32.mxu0 0.0
      %630 = vmatmul.mubr.f32.gmra.mrb[0].mxu0 %v492
      %v631 = vpop.f32.mrb[0].mxu0
      %v632 = vadd.f32 %v439, %v631
      %v633 = vpop.f32.mrb[0].mxu0
      %634 = vmatprep.mubr.f32.mxu0 0.0
      %635 = vmatmul.mubr.f32.gmra.mrb[0].mxu0 %v495
      %v636 = vpop.f32.mrb[0].mxu0
      %v637 = vadd.f32 %v444, %v636
      %v638 = vpop.f32.mrb[0].mxu0
      %639 = vmatprep.mubr.f32.mxu0 0.0
      %640 = vmatmul.mubr.f32.gmra.mrb[0].mxu0 %v498
      %v641 = vpop.f32.mrb[0].mxu0
      %v642 = vadd.f32 %v449, %v641
      %v643 = vpop.f32.mrb[0].mxu0
      %644 = vdwg.mxu0
      %v645 = vld [vmem:[%s6] sm:$0xff]
      %v646 = vld [vmem:[%s6 + $0x8] sm:$0xff]
      %v647 = vld [vmem:[%s6 + $0x10] sm:$0xff]
      %v648 = vld [vmem:[%s6 + $0x18] sm:$0xff]
      %v649 = vld [vmem:[%s6 + $0x20] sm:$0xff]
      %v650 = vld [vmem:[%s6 + $0x28] sm:$0xff]
      %v651 = vld [vmem:[%s6 + $0x30] sm:$0xff]
      %v652 = vld [vmem:[%s6 + $0x38] sm:$0xff]
      %v653 = vld [vmem:[%s6 + $0x40] sm:$0xff]
      %v654 = vld [vmem:[%s6 + $0x48] sm:$0xff]
      %v655 = vld [vmem:[%s6 + $0x50] sm:$0xff]
      %v656 = vld [vmem:[%s6 + $0x58] sm:$0xff]
      %v657 = vld [vmem:[%s6 + $0x60] sm:$0xff]
      %v658 = vld [vmem:[%s6 + $0x68] sm:$0xff]
      %v659 = vld [vmem:[%s6 + $0x70] sm:$0xff]
      %v660 = vld [vmem:[%s6 + $0x78] sm:$0xff]
      %v661 = vld [vmem:[%s3] sm:$0xff]
      %v663 = vsel %vm258, %v645, 0
      %v666 = vsel %vm258, %v646, 0
      %v669 = vsel %vm258, %v647, 0
      %v672 = vsel %vm258, %v648, 0
      %v675 = vsel %vm258, %v649, 0
      %v678 = vsel %vm258, %v650, 0
      %v681 = vsel %vm258, %v651, 0
      %v684 = vsel %vm258, %v652, 0
      %v687 = vsel %vm258, %v653, 0
      %v690 = vsel %vm258, %v654, 0
      %v693 = vsel %vm258, %v655, 0
      %v696 = vsel %vm258, %v656, 0
      %v699 = vsel %vm258, %v657, 0
      %v702 = vsel %vm258, %v658, 0
      %v705 = vsel %vm258, %v659, 0
      %v708 = vsel %vm258, %v660, 0
      %710 = vmatprep.subr.mxu0 0.0
      %711 = vmatpush1.msra.mxu0 %v661
      %712 = vmatprep.subr.mxu0 0.0
      %713 = vmatpush1.msra.mxu0 0.0
      %714 = vmatprep.subr.mxu0 0.0
      %715 = vmatpush1.msra.mxu0 0.0
      %716 = vmatprep.subr.mxu0 0.0
      %717 = vmatpush1.msra.mxu0 0.0
      %718 = vmatprep.subr.mxu0 0.0
      %719 = vmatpush1.msra.mxu0 0.0
      %720 = vmatprep.subr.mxu0 0.0
      %721 = vmatpush1.msra.mxu0 0.0
      %722 = vmatprep.subr.mxu0 0.0
      %723 = vmatpush1.msra.mxu0 0.0
      %724 = vmatprep.subr.mxu0 0.0
      %725 = vmatpush1.msra.mxu0 0.0
      %726 = vmatprep.subr.mxu0 0.0
      %727 = vmatpush1.msra.mxu0 0.0
      %728 = vmatprep.subr.mxu0 0.0
      %729 = vmatpush1.msra.mxu0 0.0
      %730 = vmatprep.subr.mxu0 0.0
      %731 = vmatpush1.msra.mxu0 0.0
      %732 = vmatprep.subr.mxu0 0.0
      %733 = vmatpush1.msra.mxu0 0.0
      %734 = vmatprep.subr.mxu0 0.0
      %735 = vmatpush1.msra.mxu0 0.0
      %736 = vmatprep.subr.mxu0 0.0
      %737 = vmatpush1.msra.mxu0 0.0
      %738 = vmatprep.subr.mxu0 0.0
      %739 = vmatpush1.msra.mxu0 0.0
      %740 = vmatprep.subr.mxu0 0.0
      %741 = vmatpush1.msra.mxu0 0.0
      %742 = vmatprep.subr.mxu0 0.0
      %743 = vmatpush1.msra.mxu0 0.0
      %744 = vmatprep.subr.mxu0 0.0
      %745 = vmatpush1.msra.mxu0 0.0
      %746 = vmatprep.subr.mxu0 0.0
      %747 = vmatpush1.msra.mxu0 0.0
      %748 = vmatprep.subr.mxu0 0.0
      %749 = vmatpush1.msra.mxu0 0.0
      %750 = vmatprep.subr.mxu0 0.0
      %751 = vmatpush1.msra.mxu0 0.0
      %752 = vmatprep.subr.mxu0 0.0
      %753 = vmatpush1.msra.mxu0 0.0
      %754 = vmatprep.subr.mxu0 0.0
      %755 = vmatpush1.msra.mxu0 0.0
      %756 = vmatprep.subr.mxu0 0.0
      %757 = vmatpush1.msra.mxu0 0.0
      %758 = vmatprep.subr.mxu0 0.0
      %759 = vmatpush1.msra.mxu0 0.0
      %760 = vmatprep.subr.mxu0 0.0
      %761 = vmatpush1.msra.mxu0 0.0
      %762 = vmatprep.subr.mxu0 0.0
      %763 = vmatpush1.msra.mxu0 0.0
      %764 = vmatprep.subr.mxu0 0.0
      %765 = vmatpush1.msra.mxu0 0.0
      %766 = vmatprep.subr.mxu0 0.0
      %767 = vmatpush1.msra.mxu0 0.0
      %768 = vmatprep.subr.mxu0 0.0
      %769 = vmatpush1.msra.mxu0 0.0
      %770 = vmatprep.subr.mxu0 0.0
      %771 = vmatpush1.msra.mxu0 0.0
      %772 = vmatprep.subr.mxu0 0.0
      %773 = vmatpush1.msra.mxu0 0.0
      %774 = vmatprep.mubr.f32.mxu0 0.0
      %775 = vmatmul.mubr.f32.gmra.mrb[0].mxu0 %v663
      %v776 = vpop.f32.mrb[0].mxu0
      %v777 = vadd.f32 0.0, %v776
      %v778 = vpop.f32.mrb[0].mxu0
      %779 = vmatprep.mubr.f32.mxu0 0.0
      %780 = vmatmul.mubr.f32.gmra.mrb[0].mxu0 %v666
      %v781 = vpop.f32.mrb[0].mxu0
      %v782 = vadd.f32 0.0, %v781
      %v783 = vpop.f32.mrb[0].mxu0
      %784 = vmatprep.mubr.f32.mxu0 0.0
      %785 = vmatmul.mubr.f32.gmra.mrb[0].mxu0 %v669
      %v786 = vpop.f32.mrb[0].mxu0
      %v787 = vadd.f32 0.0, %v786
      %v788 = vpop.f32.mrb[0].mxu0
      %789 = vmatprep.mubr.f32.mxu0 0.0
      %790 = vmatmul.mubr.f32.gmra.mrb[0].mxu0 %v672
      %v791 = vpop.f32.mrb[0].mxu0
      %v792 = vadd.f32 0.0, %v791
      %v793 = vpop.f32.mrb[0].mxu0
      %794 = vmatprep.mubr.f32.mxu0 0.0
      %795 = vmatmul.mubr.f32.gmra.mrb[0].mxu0 %v675
      %v796 = vpop.f32.mrb[0].mxu0
      %v797 = vadd.f32 0.0, %v796
      %v798 = vpop.f32.mrb[0].mxu0
      %799 = vmatprep.mubr.f32.mxu0 0.0
      %800 = vmatmul.mubr.f32.gmra.mrb[0].mxu0 %v678
      %v801 = vpop.f32.mrb[0].mxu0
      %v802 = vadd.f32 0.0, %v801
      %v803 = vpop.f32.mrb[0].mxu0
      %804 = vmatprep.mubr.f32.mxu0 0.0
      %805 = vmatmul.mubr.f32.gmra.mrb[0].mxu0 %v681
      %v806 = vpop.f32.mrb[0].mxu0
      %v807 = vadd.f32 0.0, %v806
      %v808 = vpop.f32.mrb[0].mxu0
      %809 = vmatprep.mubr.f32.mxu0 0.0
      %810 = vmatmul.mubr.f32.gmra.mrb[0].mxu0 %v684
      %v811 = vpop.f32.mrb[0].mxu0
      %v812 = vadd.f32 0.0, %v811
      %v813 = vpop.f32.mrb[0].mxu0
      %814 = vmatprep.mubr.f32.mxu0 0.0
      %815 = vmatmul.mubr.f32.gmra.mrb[0].mxu0 %v687
      %v816 = vpop.f32.mrb[0].mxu0
      %v817 = vadd.f32 0.0, %v816
      %v818 = vpop.f32.mrb[0].mxu0
      %819 = vmatprep.mubr.f32.mxu0 0.0
      %820 = vmatmul.mubr.f32.gmra.mrb[0].mxu0 %v690
      %v821 = vpop.f32.mrb[0].mxu0
      %v822 = vadd.f32 0.0, %v821
      %v823 = vpop.f32.mrb[0].mxu0
      %824 = vmatprep.mubr.f32.mxu0 0.0
      %825 = vmatmul.mubr.f32.gmra.mrb[0].mxu0 %v693
      %v826 = vpop.f32.mrb[0].mxu0
      %v827 = vadd.f32 0.0, %v826
      %v828 = vpop.f32.mrb[0].mxu0
      %829 = vmatprep.mubr.f32.mxu0 0.0
      %830 = vmatmul.mubr.f32.gmra.mrb[0].mxu0 %v696
      %v831 = vpop.f32.mrb[0].mxu0
      %v832 = vadd.f32 0.0, %v831
      %v833 = vpop.f32.mrb[0].mxu0
      %834 = vmatprep.mubr.f32.mxu0 0.0
      %835 = vmatmul.mubr.f32.gmra.mrb[0].mxu0 %v699
      %v836 = vpop.f32.mrb[0].mxu0
      %v837 = vadd.f32 0.0, %v836
      %v838 = vpop.f32.mrb[0].mxu0
      %839 = vmatprep.mubr.f32.mxu0 0.0
      %840 = vmatmul.mubr.f32.gmra.mrb[0].mxu0 %v702
      %v841 = vpop.f32.mrb[0].mxu0
      %v842 = vadd.f32 0.0, %v841
      %v843 = vpop.f32.mrb[0].mxu0
      %844 = vmatprep.mubr.f32.mxu0 0.0
      %845 = vmatmul.mubr.f32.gmra.mrb[0].mxu0 %v705
      %v846 = vpop.f32.mrb[0].mxu0
      %v847 = vadd.f32 0.0, %v846
      %v848 = vpop.f32.mrb[0].mxu0
      %849 = vmatprep.mubr.f32.mxu0 0.0
      %850 = vmatmul.mubr.f32.gmra.mrb[0].mxu0 %v708
      %v851 = vpop.f32.mrb[0].mxu0
      %v852 = vadd.f32 0.0, %v851
      %v853 = vpop.f32.mrb[0].mxu0
      %854 = vdwg.mxu0
      %v855 = vadd.f32 %v567, %v777
      %v856 = vadd.f32 %v572, %v782
      %v857 = vadd.f32 %v577, %v787
      %v858 = vadd.f32 %v582, %v792
      %v859 = vadd.f32 %v587, %v797
      %v860 = vadd.f32 %v592, %v802
      %v861 = vadd.f32 %v597, %v807
      %v862 = vadd.f32 %v602, %v812
      %v863 = vadd.f32 %v607, %v817
      %v864 = vadd.f32 %v612, %v822
      %v865 = vadd.f32 %v617, %v827
      %v866 = vadd.f32 %v622, %v832
      %v867 = vadd.f32 %v627, %v837
      %v868 = vadd.f32 %v632, %v842
      %v869 = vadd.f32 %v637, %v847
      %v870 = vadd.f32 %v642, %v852
      %v871 = vld [vmem:[%s7] sm:$0xff]
      %v872 = vld [vmem:[%s7 + $0x8] sm:$0xff]
      %v873 = vld [vmem:[%s7 + $0x10] sm:$0xff]
      %v874 = vld [vmem:[%s7 + $0x18] sm:$0xff]
      %v875 = vld [vmem:[%s7 + $0x20] sm:$0xff]
      %v876 = vld [vmem:[%s7 + $0x28] sm:$0xff]
      %v877 = vld [vmem:[%s7 + $0x30] sm:$0xff]
      %v878 = vld [vmem:[%s7 + $0x38] sm:$0xff]
      %v879 = vld [vmem:[%s7 + $0x40] sm:$0xff]
      %v880 = vld [vmem:[%s7 + $0x48] sm:$0xff]
      %v881 = vld [vmem:[%s7 + $0x50] sm:$0xff]
      %v882 = vld [vmem:[%s7 + $0x58] sm:$0xff]
      %v883 = vld [vmem:[%s7 + $0x60] sm:$0xff]
      %v884 = vld [vmem:[%s7 + $0x68] sm:$0xff]
      %v885 = vld [vmem:[%s7 + $0x70] sm:$0xff]
      %v886 = vld [vmem:[%s7 + $0x78] sm:$0xff]
      %888 = vset.pattern.permute.xlu0 0
      %889 = vperm.xlu0 %888, %v871
      %v890 = vpop.permute.xlu0 %889
      %893 = vset.pattern.permute.xlu0 0
      %894 = vperm.xlu0 %893, %v872
      %v895 = vpop.permute.xlu0 %894
      %898 = vset.pattern.permute.xlu0 0
      %899 = vperm.xlu0 %898, %v873
      %v900 = vpop.permute.xlu0 %899
      %903 = vset.pattern.permute.xlu0 0
      %904 = vperm.xlu0 %903, %v874
      %v905 = vpop.permute.xlu0 %904
      %908 = vset.pattern.permute.xlu0 0
      %909 = vperm.xlu0 %908, %v875
      %v910 = vpop.permute.xlu0 %909
      %913 = vset.pattern.permute.xlu0 0
      %914 = vperm.xlu0 %913, %v876
      %v915 = vpop.permute.xlu0 %914
      %918 = vset.pattern.permute.xlu0 0
      %919 = vperm.xlu0 %918, %v877
      %v920 = vpop.permute.xlu0 %919
      %923 = vset.pattern.permute.xlu0 0
      %924 = vperm.xlu0 %923, %v878
      %v925 = vpop.permute.xlu0 %924
      %928 = vset.pattern.permute.xlu0 0
      %929 = vperm.xlu0 %928, %v879
      %v930 = vpop.permute.xlu0 %929
      %933 = vset.pattern.permute.xlu0 0
      %934 = vperm.xlu0 %933, %v880
      %v935 = vpop.permute.xlu0 %934
      %938 = vset.pattern.permute.xlu0 0
      %939 = vperm.xlu0 %938, %v881
      %v940 = vpop.permute.xlu0 %939
      %943 = vset.pattern.permute.xlu0 0
      %944 = vperm.xlu0 %943, %v882
      %v945 = vpop.permute.xlu0 %944
      %948 = vset.pattern.permute.xlu0 0
      %949 = vperm.xlu0 %948, %v883
      %v950 = vpop.permute.xlu0 %949
      %953 = vset.pattern.permute.xlu0 0
      %954 = vperm.xlu0 %953, %v884
      %v955 = vpop.permute.xlu0 %954
      %958 = vset.pattern.permute.xlu0 0
      %959 = vperm.xlu0 %958, %v885
      %v960 = vpop.permute.xlu0 %959
      %963 = vset.pattern.permute.xlu0 0
      %964 = vperm.xlu0 %963, %v886
      %v965 = vpop.permute.xlu0 %964
      %v967 = vadd.f32 %v855, %v890
      %v968 = vadd.f32 %v856, %v895
      %v969 = vadd.f32 %v857, %v900
      %v970 = vadd.f32 %v858, %v905
      %v971 = vadd.f32 %v859, %v910
      %v972 = vadd.f32 %v860, %v915
      %v973 = vadd.f32 %v861, %v920
      %v974 = vadd.f32 %v862, %v925
      %v975 = vadd.f32 %v863, %v930
      %v976 = vadd.f32 %v864, %v935
      %v977 = vadd.f32 %v865, %v940
      %v978 = vadd.f32 %v866, %v945
      %v979 = vadd.f32 %v867, %v950
      %v980 = vadd.f32 %v868, %v955
      %v981 = vadd.f32 %v869, %v960
      %v982 = vadd.f32 %v870, %v965
      %v983 = vtanh.pop %v967
      %v984 = vtanh.pop %v968
      %v985 = vtanh.pop %v969
      %v986 = vtanh.pop %v970
      %v987 = vtanh.pop %v971
      %v988 = vtanh.pop %v972
      %v989 = vtanh.pop %v973
      %v990 = vtanh.pop %v974
      %v991 = vtanh.pop %v975
      %v992 = vtanh.pop %v976
      %v993 = vtanh.pop %v977
      %v994 = vtanh.pop %v978
      %v995 = vtanh.pop %v979
      %v996 = vtanh.pop %v980
      %v997 = vtanh.pop %v981
      %v998 = vtanh.pop %v982
      %v999 = vld [vmem:[%s8] sm:$0xff]
      %v1000 = vld [vmem:[%s8 + $0x8] sm:$0xff]
      %v1001 = vld [vmem:[%s8 + $0x10] sm:$0xff]
      %v1002 = vld [vmem:[%s8 + $0x18] sm:$0xff]
      %v1003 = vld [vmem:[%s8 + $0x20] sm:$0xff]
      %v1004 = vld [vmem:[%s8 + $0x28] sm:$0xff]
      %v1005 = vld [vmem:[%s8 + $0x30] sm:$0xff]
      %v1006 = vld [vmem:[%s8 + $0x38] sm:$0xff]
      %v1007 = vld [vmem:[%s8 + $0x40] sm:$0xff]
      %v1008 = vld [vmem:[%s8 + $0x48] sm:$0xff]
      %v1009 = vld [vmem:[%s8 + $0x50] sm:$0xff]
      %v1010 = vld [vmem:[%s8 + $0x58] sm:$0xff]
      %v1011 = vld [vmem:[%s8 + $0x60] sm:$0xff]
      %v1012 = vld [vmem:[%s8 + $0x68] sm:$0xff]
      %v1013 = vld [vmem:[%s8 + $0x70] sm:$0xff]
      %v1014 = vld [vmem:[%s8 + $0x78] sm:$0xff]
      %v1015 = vld [vmem:[%s9] sm:$0xff]
      %v1016 = vld [vmem:[%s9 + $0x8] sm:$0xff]
      %v1017 = vld [vmem:[%s9 + $0x10] sm:$0xff]
      %v1018 = vld [vmem:[%s9 + $0x18] sm:$0xff]
      %v1019 = vld [vmem:[%s9 + $0x20] sm:$0xff]
      %v1020 = vld [vmem:[%s9 + $0x28] sm:$0xff]
      %v1021 = vld [vmem:[%s9 + $0x30] sm:$0xff]
      %v1022 = vld [vmem:[%s9 + $0x38] sm:$0xff]
      %v1023 = vld [vmem:[%s9 + $0x40] sm:$0xff]
      %v1024 = vld [vmem:[%s9 + $0x48] sm:$0xff]
      %v1025 = vld [vmem:[%s9 + $0x50] sm:$0xff]
      %v1026 = vld [vmem:[%s9 + $0x58] sm:$0xff]
      %v1027 = vld [vmem:[%s9 + $0x60] sm:$0xff]
      %v1028 = vld [vmem:[%s9 + $0x68] sm:$0xff]
      %v1029 = vld [vmem:[%s9 + $0x70] sm:$0xff]
      %v1030 = vld [vmem:[%s9 + $0x78] sm:$0xff]
      %1032 = vset.pattern.permute.xlu0 0
      %1033 = vperm.xlu0 %1032, %v1015
      %v1034 = vpop.permute.xlu0 %1033
      %1037 = vset.pattern.permute.xlu0 0
      %1038 = vperm.xlu0 %1037, %v1016
      %v1039 = vpop.permute.xlu0 %1038
      %1042 = vset.pattern.permute.xlu0 0
      %1043 = vperm.xlu0 %1042, %v1017
      %v1044 = vpop.permute.xlu0 %1043
      %1047 = vset.pattern.permute.xlu0 0
      %1048 = vperm.xlu0 %1047, %v1018
      %v1049 = vpop.permute.xlu0 %1048
      %1052 = vset.pattern.permute.xlu0 0
      %1053 = vperm.xlu0 %1052, %v1019
      %v1054 = vpop.permute.xlu0 %1053
      %1057 = vset.pattern.permute.xlu0 0
      %1058 = vperm.xlu0 %1057, %v1020
      %v1059 = vpop.permute.xlu0 %1058
      %1062 = vset.pattern.permute.xlu0 0
      %1063 = vperm.xlu0 %1062, %v1021
      %v1064 = vpop.permute.xlu0 %1063
      %1067 = vset.pattern.permute.xlu0 0
      %1068 = vperm.xlu0 %1067, %v1022
      %v1069 = vpop.permute.xlu0 %1068
      %1072 = vset.pattern.permute.xlu0 0
      %1073 = vperm.xlu0 %1072, %v1023
      %v1074 = vpop.permute.xlu0 %1073
      %1077 = vset.pattern.permute.xlu0 0
      %1078 = vperm.xlu0 %1077, %v1024
      %v1079 = vpop.permute.xlu0 %1078
      %1082 = vset.pattern.permute.xlu0 0
      %1083 = vperm.xlu0 %1082, %v1025
      %v1084 = vpop.permute.xlu0 %1083
      %1087 = vset.pattern.permute.xlu0 0
      %1088 = vperm.xlu0 %1087, %v1026
      %v1089 = vpop.permute.xlu0 %1088
      %1092 = vset.pattern.permute.xlu0 0
      %1093 = vperm.xlu0 %1092, %v1027
      %v1094 = vpop.permute.xlu0 %1093
      %1097 = vset.pattern.permute.xlu0 0
      %1098 = vperm.xlu0 %1097, %v1028
      %v1099 = vpop.permute.xlu0 %1098
      %1102 = vset.pattern.permute.xlu0 0
      %1103 = vperm.xlu0 %1102, %v1029
      %v1104 = vpop.permute.xlu0 %1103
      %1107 = vset.pattern.permute.xlu0 0
      %1108 = vperm.xlu0 %1107, %v1030
      %v1109 = vpop.permute.xlu0 %1108
      %1111 = vmatprep.subr.mxu0 0.0
      %1112 = vmatpush1.msra.mxu0 %v983
      %1113 = vmatprep.subr.mxu0 0.0
      %1114 = vmatpush1.msra.mxu0 %v984
      %1115 = vmatprep.subr.mxu0 0.0
      %1116 = vmatpush1.msra.mxu0 %v985
      %1117 = vmatprep.subr.mxu0 0.0
      %1118 = vmatpush1.msra.mxu0 %v986
      %1119 = vmatprep.subr.mxu0 0.0
      %1120 = vmatpush1.msra.mxu0 %v987
      %1121 = vmatprep.subr.mxu0 0.0
      %1122 = vmatpush1.msra.mxu0 %v988
      %1123 = vmatprep.subr.mxu0 0.0
      %1124 = vmatpush1.msra.mxu0 %v989
      %1125 = vmatprep.subr.mxu0 0.0
      %1126 = vmatpush1.msra.mxu0 %v990
      %1127 = vmatprep.subr.mxu0 0.0
      %1128 = vmatpush1.msra.mxu0 %v991
      %1129 = vmatprep.subr.mxu0 0.0
      %1130 = vmatpush1.msra.mxu0 %v992
      %1131 = vmatprep.subr.mxu0 0.0
      %1132 = vmatpush1.msra.mxu0 %v993
      %1133 = vmatprep.subr.mxu0 0.0
      %1134 = vmatpush1.msra.mxu0 %v994
      %1135 = vmatprep.subr.mxu0 0.0
      %1136 = vmatpush1.msra.mxu0 %v995
      %1137 = vmatprep.subr.mxu0 0.0
      %1138 = vmatpush1.msra.mxu0 %v996
      %1139 = vmatprep.subr.mxu0 0.0
      %1140 = vmatpush1.msra.mxu0 %v997
      %1141 = vmatprep.subr.mxu0 0.0
      %1142 = vmatpush1.msra.mxu0 %v998
      %1143 = vmatprep.subr.mxu0 0.0
      %1144 = vmatpush1.msra.mxu0 0.0
      %1145 = vmatprep.subr.mxu0 0.0
      %1146 = vmatpush1.msra.mxu0 0.0
      %1147 = vmatprep.subr.mxu0 0.0
      %1148 = vmatpush1.msra.mxu0 0.0
      %1149 = vmatprep.subr.mxu0 0.0
      %1150 = vmatpush1.msra.mxu0 0.0
      %1151 = vmatprep.subr.mxu0 0.0
      %1152 = vmatpush1.msra.mxu0 0.0
      %1153 = vmatprep.subr.mxu0 0.0
      %1154 = vmatpush1.msra.mxu0 0.0
      %1155 = vmatprep.subr.mxu0 0.0
      %1156 = vmatpush1.msra.mxu0 0.0
      %1157 = vmatprep.subr.mxu0 0.0
      %1158 = vmatpush1.msra.mxu0 0.0
      %1159 = vmatprep.subr.mxu0 0.0
      %1160 = vmatpush1.msra.mxu0 0.0
      %1161 = vmatprep.subr.mxu0 0.0
      %1162 = vmatpush1.msra.mxu0 0.0
      %1163 = vmatprep.subr.mxu0 0.0
      %1164 = vmatpush1.msra.mxu0 0.0
      %1165 = vmatprep.subr.mxu0 0.0
      %1166 = vmatpush1.msra.mxu0 0.0
      %1167 = vmatprep.subr.mxu0 0.0
      %1168 = vmatpush1.msra.mxu0 0.0
      %1169 = vmatprep.subr.mxu0 0.0
      %1170 = vmatpush1.msra.mxu0 0.0
      %1171 = vmatprep.subr.mxu0 0.0
      %1172 = vmatpush1.msra.mxu0 0.0
      %1173 = vmatprep.subr.mxu0 0.0
      %1174 = vmatpush1.msra.mxu0 0.0
      %1175 = vmatprep.mubr.f32.mxu0 0.0
      %1176 = vmatmul.mubr.f32.gmra.mrb[0].mxu0 %v999
      %v1177 = vpop.f32.mrb[0].mxu0
      %v1178 = vadd.f32 %v1034, %v1177
      %v1179 = vpop.f32.mrb[0].mxu0
      %1180 = vmatprep.mubr.f32.mxu0 0.0
      %1181 = vmatmul.mubr.f32.gmra.mrb[0].mxu0 %v1000
      %v1182 = vpop.f32.mrb[0].mxu0
      %v1183 = vadd.f32 %v1039, %v1182
      %v1184 = vpop.f32.mrb[0].mxu0
      %1185 = vmatprep.mubr.f32.mxu0 0.0
      %1186 = vmatmul.mubr.f32.gmra.mrb[0].mxu0 %v1001
      %v1187 = vpop.f32.mrb[0].mxu0
      %v1188 = vadd.f32 %v1044, %v1187
      %v1189 = vpop.f32.mrb[0].mxu0
      %1190 = vmatprep.mubr.f32.mxu0 0.0
      %1191 = vmatmul.mubr.f32.gmra.mrb[0].mxu0 %v1002
      %v1192 = vpop.f32.mrb[0].mxu0
      %v1193 = vadd.f32 %v1049, %v1192
      %v1194 = vpop.f32.mrb[0].mxu0
      %1195 = vmatprep.mubr.f32.mxu0 0.0
      %1196 = vmatmul.mubr.f32.gmra.mrb[0].mxu0 %v1003
      %v1197 = vpop.f32.mrb[0].mxu0
      %v1198 = vadd.f32 %v1054, %v1197
      %v1199 = vpop.f32.mrb[0].mxu0
      %1200 = vmatprep.mubr.f32.mxu0 0.0
      %1201 = vmatmul.mubr.f32.gmra.mrb[0].mxu0 %v1004
      %v1202 = vpop.f32.mrb[0].mxu0
      %v1203 = vadd.f32 %v1059, %v1202
      %v1204 = vpop.f32.mrb[0].mxu0
      %1205 = vmatprep.mubr.f32.mxu0 0.0
      %1206 = vmatmul.mubr.f32.gmra.mrb[0].mxu0 %v1005
      %v1207 = vpop.f32.mrb[0].mxu0
      %v1208 = vadd.f32 %v1064, %v1207
      %v1209 = vpop.f32.mrb[0].mxu0
      %1210 = vmatprep.mubr.f32.mxu0 0.0
      %1211 = vmatmul.mubr.f32.gmra.mrb[0].mxu0 %v1006
      %v1212 = vpop.f32.mrb[0].mxu0
      %v1213 = vadd.f32 %v1069, %v1212
      %v1214 = vpop.f32.mrb[0].mxu0
      %1215 = vmatprep.mubr.f32.mxu0 0.0
      %1216 = vmatmul.mubr.f32.gmra.mrb[0].mxu0 %v1007
      %v1217 = vpop.f32.mrb[0].mxu0
      %v1218 = vadd.f32 %v1074, %v1217
      %v1219 = vpop.f32.mrb[0].mxu0
      %1220 = vmatprep.mubr.f32.mxu0 0.0
      %1221 = vmatmul.mubr.f32.gmra.mrb[0].mxu0 %v1008
      %v1222 = vpop.f32.mrb[0].mxu0
      %v1223 = vadd.f32 %v1079, %v1222
      %v1224 = vpop.f32.mrb[0].mxu0
      %1225 = vmatprep.mubr.f32.mxu0 0.0
      %1226 = vmatmul.mubr.f32.gmra.mrb[0].mxu0 %v1009
      %v1227 = vpop.f32.mrb[0].mxu0
      %v1228 = vadd.f32 %v1084, %v1227
      %v1229 = vpop.f32.mrb[0].mxu0
      %1230 = vmatprep.mubr.f32.mxu0 0.0
      %1231 = vmatmul.mubr.f32.gmra.mrb[0].mxu0 %v1010
      %v1232 = vpop.f32.mrb[0].mxu0
      %v1233 = vadd.f32 %v1089, %v1232
      %v1234 = vpop.f32.mrb[0].mxu0
      %1235 = vmatprep.mubr.f32.mxu0 0.0
      %1236 = vmatmul.mubr.f32.gmra.mrb[0].mxu0 %v1011
      %v1237 = vpop.f32.mrb[0].mxu0
      %v1238 = vadd.f32 %v1094, %v1237
      %v1239 = vpop.f32.mrb[0].mxu0
      %1240 = vmatprep.mubr.f32.mxu0 0.0
      %1241 = vmatmul.mubr.f32.gmra.mrb[0].mxu0 %v1012
      %v1242 = vpop.f32.mrb[0].mxu0
      %v1243 = vadd.f32 %v1099, %v1242
      %v1244 = vpop.f32.mrb[0].mxu0
      %1245 = vmatprep.mubr.f32.mxu0 0.0
      %1246 = vmatmul.mubr.f32.gmra.mrb[0].mxu0 %v1013
      %v1247 = vpop.f32.mrb[0].mxu0
      %v1248 = vadd.f32 %v1104, %v1247
      %v1249 = vpop.f32.mrb[0].mxu0
      %1250 = vmatprep.mubr.f32.mxu0 0.0
      %1251 = vmatmul.mubr.f32.gmra.mrb[0].mxu0 %v1014
      %v1252 = vpop.f32.mrb[0].mxu0
      %v1253 = vadd.f32 %v1109, %v1252
      %v1254 = vpop.f32.mrb[0].mxu0
      %1255 = vdwg.mxu0
      %v1256 = vtanh.pop %v1178
      %v1257 = vtanh.pop %v1183
      %v1258 = vtanh.pop %v1188
      %v1259 = vtanh.pop %v1193
      %v1260 = vtanh.pop %v1198
      %v1261 = vtanh.pop %v1203
      %v1262 = vtanh.pop %v1208
      %v1263 = vtanh.pop %v1213
      %v1264 = vtanh.pop %v1218
      %v1265 = vtanh.pop %v1223
      %v1266 = vtanh.pop %v1228
      %v1267 = vtanh.pop %v1233
      %v1268 = vtanh.pop %v1238
      %v1269 = vtanh.pop %v1243
      %v1270 = vtanh.pop %v1248
      %v1271 = vtanh.pop %v1253
      %1272 = vst [vmem:[#allocation4] sm:$0xff] %v1256
      %1273 = vst [vmem:[#allocation4 + $0x8] sm:$0xff] %v1257
      %1274 = vst [vmem:[#allocation4 + $0x10] sm:$0xff] %v1258
      %1275 = vst [vmem:[#allocation4 + $0x18] sm:$0xff] %v1259
      %1276 = vst [vmem:[#allocation4 + $0x20] sm:$0xff] %v1260
      %1277 = vst [vmem:[#allocation4 + $0x28] sm:$0xff] %v1261
      %1278 = vst [vmem:[#allocation4 + $0x30] sm:$0xff] %v1262
      %1279 = vst [vmem:[#allocation4 + $0x38] sm:$0xff] %v1263
      %1280 = vst [vmem:[#allocation4 + $0x40] sm:$0xff] %v1264
      %1281 = vst [vmem:[#allocation4 + $0x48] sm:$0xff] %v1265
      %1282 = vst [vmem:[#allocation4 + $0x50] sm:$0xff] %v1266
      %1283 = vst [vmem:[#allocation4 + $0x58] sm:$0xff] %v1267
      %1284 = vst [vmem:[#allocation4 + $0x60] sm:$0xff] %v1268
      %1285 = vst [vmem:[#allocation4 + $0x68] sm:$0xff] %v1269
      %1286 = vst [vmem:[#allocation4 + $0x70] sm:$0xff] %v1270
      %1287 = vst [vmem:[#allocation4 + $0x78] sm:$0xff] %v1271
    $region49: #{tpu_custom_call.1} parent=1 // pred_fallthru
      _
    // Predicated region
    $region50: #{tpu_custom_call.1} parent=1 // pred_check
      _
    $region51: #{tpu_custom_call.1} parent=1 // pred_check_branch
      %1289 = sbr.rel (0) target = $region53
    $region52: #{tpu_custom_call.1} parent=1 // pred_region
      %s1291 = ssub.s32 2048, 2048
      %1292 = vsyncadd [#allocation5], %s1291
      %s1293 = sshll.u32 [#allocation4], 4
      %s1294 = int_to_ptr.vmem [resolvable:$true] %s1293
      %1299 = dma.vmem_to_hbm [thread:$0]  %s1294, 2048, %s10, [#allocation5], 128, 128, 8
    $region53: #{tpu_custom_call.1} parent=1 // pred_fallthru
      _
    // Predicated region
    $region54: #{tpu_custom_call.1} parent=1 // pred_check
      _
    $region55: #{tpu_custom_call.1} parent=1 // pred_check_branch
      %1301 = sbr.rel (0) target = $region57
    $region56: #{tpu_custom_call.1} parent=1 // pred_region
      %1302 = dma.done [#allocation5], 2048
    $region57: #{tpu_custom_call.1} parent=1 // pred_fallthru
      _
    %1303 = vsyncpa [#allocation5], 1

</llo_original>
